<compile_context>
chip_gen: v7x
topology: tpu7x:2x2x1
jax: 0.10.0
libtpu: 0.0.40
codegen_flags: <defaults>
</compile_context>

<pallas_src>
import functools
import numpy as np
import jax
import jax.numpy as jnp
from jax.experimental import pallas as pl
from jax.experimental.pallas import tpu as pltpu


VMEM_LIMIT = 64 * 1024 * 1024  # raise scoped VMEM limit (safe threshold on v5e/v6e/v7x)


def _tile(dim, target, align):
    """Largest multiple of `align` that divides `dim` and is <= target, else full dim."""
    if dim <= target or dim % align != 0:
        return dim
    t = (min(target, dim) // align) * align
    while t >= align:
        if dim % t == 0:
            return t
        t -= align
    return dim


# --------------------------------------------------------------------------
# Kernel 1: fused RMSNorm + QKV projection
#   x:(M,D) f32, ln:(1,D) f32, wqkv:(3H, D, Dk) bf16  ->  qkv:(3H, M, Dk) bf16
# --------------------------------------------------------------------------
def _rms_qkv_kernel(x_ref, ln_ref, w_ref, o_ref, xn_ref):
    j = pl.program_id(1)

    @pl.when(j == 0)
    def _():
        x = x_ref[...]
        var = jnp.mean(x * x, axis=-1, keepdims=True)
        xn_ref[...] = (x * jax.lax.rsqrt(var + 1e-6) * ln_ref[...]).astype(xn_ref.dtype)

    o_ref[...] = jnp.dot(xn_ref[...], w_ref[...],
                         preferred_element_type=jnp.float32).astype(o_ref.dtype)


def rms_qkv_proj(x, ln_w, wqkv):
    M, D = x.shape
    G, _, Dk = wqkv.shape
    tm = _tile(M, 256, 8)
    return pl.pallas_call(
        _rms_qkv_kernel,
        out_shape=jax.ShapeDtypeStruct((G, M, Dk), jnp.bfloat16),
        grid_spec=pltpu.PrefetchScalarGridSpec(
            num_scalar_prefetch=0,
            grid=(M // tm, G),
            in_specs=[
                pl.BlockSpec((tm, D), lambda i, j: (i, 0)),
                pl.BlockSpec((1, D), lambda i, j: (0, 0)),
                pl.BlockSpec((None, D, Dk), lambda i, j: (j, 0, 0)),
            ],
            out_specs=pl.BlockSpec((None, tm, Dk), lambda i, j: (j, i, 0)),
            scratch_shapes=[pltpu.VMEM((tm, D), jnp.bfloat16)],
        ),
        compiler_params=pltpu.CompilerParams(
            dimension_semantics=("parallel", "arbitrary"),
            vmem_limit_bytes=VMEM_LIMIT),
    )(x, ln_w, wqkv)


# --------------------------------------------------------------------------
# Kernel 2: flash attention with in-kernel relative-position bias + mask.
#   qkv:(3,H,B,S,Dk) bf16, pos_bias:(H,S,S) f32, mask_bias:(B,1,S) f32
#   -> out:(H,B,S,Dk) bf16
# --------------------------------------------------------------------------
def _flash_attn_kernel(q_ref, k_ref, v_ref, pb_ref, mb_ref, o_ref,
                       m_ref, l_ref, acc_ref):
    ki = pl.program_id(3)

    @pl.when(ki == 0)
    def _():
        m_ref[...] = jnp.full_like(m_ref, -jnp.inf)
        l_ref[...] = jnp.zeros_like(l_ref)
        acc_ref[...] = jnp.zeros_like(acc_ref)

    q = q_ref[...]                                     # (tq, Dk) bf16
    k = k_ref[...]                                     # (tk, Dk) bf16
    s = jax.lax.dot_general(q, k, (((1,), (1,)), ((), ())),
                            preferred_element_type=jnp.float32)   # (tq, tk) f32
    # NOTE: T5 does NOT scale scores by 1/sqrt(Dk).
    s = s + pb_ref[...] + mb_ref[...]                  # bias + (-1e9) padding mask

    m_prev = m_ref[...]
    m_new = jnp.maximum(m_prev, jnp.max(s, axis=-1, keepdims=True))
    alpha = jnp.exp(m_prev - m_new)
    p = jnp.exp(s - m_new)
    l_ref[...] = alpha * l_ref[...] + jnp.sum(p, axis=-1, keepdims=True)
    acc_ref[...] = alpha * acc_ref[...] + jnp.dot(
        p.astype(v_ref.dtype), v_ref[...], preferred_element_type=jnp.float32)
    m_ref[...] = m_new

    @pl.when(ki == pl.num_programs(3) - 1)
    def _():
        o_ref[...] = (acc_ref[...] *
                      pl.reciprocal(l_ref[...], approx=True)).astype(o_ref.dtype)


def flash_attention(qkv5, pos_bias, mask_bias):
    _, H, B, S, Dk = qkv5.shape
    tq = _tile(S, 256, 8)
    tk = _tile(S, 512, 128)
    q_spec = pl.BlockSpec((None, None, None, tq, Dk),
                          lambda h, b, qi, ki: (0, h, b, qi, 0))
    k_spec = pl.BlockSpec((None, None, None, tk, Dk),
                          lambda h, b, qi, ki: (1, h, b, ki, 0))
    v_spec = pl.BlockSpec((None, None, None, tk, Dk),
                          lambda h, b, qi, ki: (2, h, b, ki, 0))
    pb_spec = pl.BlockSpec((None, tq, tk), lambda h, b, qi, ki: (h, qi, ki))
    mb_spec = pl.BlockSpec((None, 1, tk), lambda h, b, qi, ki: (b, 0, ki))
    return pl.pallas_call(
        _flash_attn_kernel,
        out_shape=jax.ShapeDtypeStruct((H, B, S, Dk), jnp.bfloat16),
        grid_spec=pltpu.PrefetchScalarGridSpec(
            num_scalar_prefetch=0,
            grid=(H, B, S // tq, S // tk),
            in_specs=[q_spec, k_spec, v_spec, pb_spec, mb_spec],
            out_specs=pl.BlockSpec((None, None, tq, Dk),
                                   lambda h, b, qi, ki: (h, b, qi, 0)),
            scratch_shapes=[pltpu.VMEM((tq, 1), jnp.float32),
                            pltpu.VMEM((tq, 1), jnp.float32),
                            pltpu.VMEM((tq, Dk), jnp.float32)],
        ),
        compiler_params=pltpu.CompilerParams(
            dimension_semantics=("parallel", "parallel", "parallel", "arbitrary"),
            vmem_limit_bytes=VMEM_LIMIT),
    )(qkv5, qkv5, qkv5, pos_bias, mask_bias)


# --------------------------------------------------------------------------
# Kernel 3: attention output projection (reduce over heads) + residual add.
#   attn:(H,M,Dk) bf16, wo:(H,Dk,D) bf16, resid:(M,D) f32 -> (M,D) f32
# --------------------------------------------------------------------------
def _attn_out_proj_kernel(a_ref, w_ref, r_ref, o_ref, acc_ref):
    h = pl.program_id(1)

    @pl.when(h == 0)
    def _():
        acc_ref[...] = jnp.zeros_like(acc_ref)

    acc_ref[...] += jnp.dot(a_ref[...], w_ref[...],
                            preferred_element_type=jnp.float32)

    @pl.when(h == pl.num_programs(1) - 1)
    def _():
        o_ref[...] = acc_ref[...] + r_ref[...]


def attn_out_proj(attn, wo, resid):
    H, M, Dk = attn.shape
    D = wo.shape[2]
    tm = _tile(M, 256, 8)
    return pl.pallas_call(
        _attn_out_proj_kernel,
        out_shape=jax.ShapeDtypeStruct((M, D), jnp.float32),
        grid_spec=pltpu.PrefetchScalarGridSpec(
            num_scalar_prefetch=0,
            grid=(M // tm, H),
            in_specs=[
                pl.BlockSpec((None, tm, Dk), lambda i, h: (h, i, 0)),
                pl.BlockSpec((None, Dk, D), lambda i, h: (h, 0, 0)),
                pl.BlockSpec((tm, D), lambda i, h: (i, 0)),
            ],
            out_specs=pl.BlockSpec((tm, D), lambda i, h: (i, 0)),
            scratch_shapes=[pltpu.VMEM((tm, D), jnp.float32)],
        ),
        compiler_params=pltpu.CompilerParams(
            dimension_semantics=("parallel", "arbitrary"),
            vmem_limit_bytes=VMEM_LIMIT),
    )(attn, wo, resid)


# --------------------------------------------------------------------------
# Kernel 4: fused FFN block: RMSNorm -> wi -> ReLU -> wo (tiled over d_ff) + residual.
#   x:(M,D) f32, ln:(1,D) f32, wi:(D,F) bf16, wo:(F,D) bf16 -> (M,D) f32
# --------------------------------------------------------------------------
def _ffn_kernel(x_ref, ln_ref, wi_ref, wo_ref, o_ref, xn_ref, acc_ref):
    j = pl.program_id(1)

    @pl.when(j == 0)
    def _():
        x = x_ref[...]
        var = jnp.mean(x * x, axis=-1, keepdims=True)
        xn_ref[...] = (x * jax.lax.rsqrt(var + 1e-6) * ln_ref[...]).astype(xn_ref.dtype)
        acc_ref[...] = jnp.zeros_like(acc_ref)

    h = jnp.dot(xn_ref[...], wi_ref[...], preferred_element_type=jnp.float32)
    h = jnp.maximum(h, 0.0).astype(wo_ref.dtype)
    acc_ref[...] += jnp.dot(h, wo_ref[...], preferred_element_type=jnp.float32)

    @pl.when(j == pl.num_programs(1) - 1)
    def _():
        o_ref[...] = acc_ref[...] + x_ref[...]


def ffn_block(x, ln_w, wi, wo):
    M, D = x.shape
    F = wi.shape[1]
    tm = _tile(M, 256, 8)
    tf = _tile(F, 512, 128)
    return pl.pallas_call(
        _ffn_kernel,
        out_shape=jax.ShapeDtypeStruct((M, D), jnp.float32),
        grid_spec=pltpu.PrefetchScalarGridSpec(
            num_scalar_prefetch=0,
            grid=(M // tm, F // tf),
            in_specs=[
                pl.BlockSpec((tm, D), lambda i, j: (i, 0)),
                pl.BlockSpec((1, D), lambda i, j: (0, 0)),
                pl.BlockSpec((D, tf), lambda i, j: (0, j)),
                pl.BlockSpec((tf, D), lambda i, j: (j, 0)),
            ],
            out_specs=pl.BlockSpec((tm, D), lambda i, j: (i, 0)),
            scratch_shapes=[pltpu.VMEM((tm, D), jnp.bfloat16),
                            pltpu.VMEM((tm, D), jnp.float32)],
        ),
        compiler_params=pltpu.CompilerParams(
            dimension_semantics=("parallel", "arbitrary"),
            vmem_limit_bytes=VMEM_LIMIT),
    )(x, ln_w, wi, wo)


# --------------------------------------------------------------------------
# Kernel 5: final RMSNorm + mean-pool over sequence + classifier (lane-padded logits).
#   x:(B,S,D) f32, ln:(1,D), cls_w:(D,Lp), cls_b:(1,Lp) -> (B,Lp) f32
# --------------------------------------------------------------------------
def _pool_cls_kernel(x_ref, ln_ref, w_ref, b_ref, o_ref, acc_ref, *, seq_len):
    si = pl.program_id(0)

    @pl.when(si == 0)
    def _():
        acc_ref[...] = jnp.zeros_like(acc_ref)

    x = x_ref[...]                                    # (B, ts, D)
    var = jnp.mean(x * x, axis=-1, keepdims=True)
    xn = x * jax.lax.rsqrt(var + 1e-6) * ln_ref[...]
    acc_ref[...] += jnp.sum(xn, axis=1)               # accumulate sum over seq tiles

    @pl.when(si == pl.num_programs(0) - 1)
    def _():
        # NOTE: reference does an UNMASKED mean over axis=1 (padding included); dropout
        # is identity at inference.
        pooled = acc_ref[...] * (1.0 / seq_len)
        o_ref[...] = jnp.dot(pooled, w_ref[...],
                             preferred_element_type=jnp.float32) + b_ref[...]


def pool_and_classify(hidden, ln_f, cls_w_pad, cls_b_pad, num_labels):
    B, S, D = hidden.shape
    Lp = cls_w_pad.shape[1]
    ts = _tile(S, 256, 8)
    kernel = functools.partial(_pool_cls_kernel, seq_len=S)
    out = pl.pallas_call(
        kernel,
        out_shape=jax.ShapeDtypeStruct((B, Lp), jnp.float32),
        grid_spec=pltpu.PrefetchScalarGridSpec(
            num_scalar_prefetch=0,
            grid=(S // ts,),
            in_specs=[
                pl.BlockSpec((B, ts, D), lambda si: (0, si, 0)),
                pl.BlockSpec((1, D), lambda si: (0, 0)),
                pl.BlockSpec((D, Lp), lambda si: (0, 0)),
                pl.BlockSpec((1, Lp), lambda si: (0, 0)),
            ],
            out_specs=pl.BlockSpec((B, Lp), lambda si: (0, 0)),
            scratch_shapes=[pltpu.VMEM((B, D), jnp.float32)],
        ),
        compiler_params=pltpu.CompilerParams(
            dimension_semantics=("arbitrary",),
            vmem_limit_bytes=VMEM_LIMIT),
    )(hidden, ln_f, cls_w_pad, cls_b_pad)
    return out[:, :num_labels]


# ----------------------------- plain-JAX glue -----------------------------

def relative_position_bucket(relative_position, num_buckets=32, max_distance=128):
    # bidirectional (encoder) bucketing, mirrors T5Attention._relative_position_bucket
    num_buckets = num_buckets // 2
    ret = (relative_position > 0).astype(jnp.int32) * num_buckets
    n = jnp.abs(relative_position)
    max_exact = num_buckets // 2
    is_small = n < max_exact
    n_safe = jnp.maximum(n, 1).astype(jnp.float32)
    val_if_large = max_exact + (
        jnp.log(n_safe / max_exact) / np.log(max_distance / max_exact)
        * (num_buckets - max_exact)
    ).astype(jnp.int32)            # truncation, matches torch .to(long)
    val_if_large = jnp.minimum(val_if_large, num_buckets - 1)
    ret = ret + jnp.where(is_small, n, val_if_large)
    return ret


def compute_position_bias(rel_bias_table, seq_len, num_heads):
    # rel_bias_table: (num_buckets, num_heads)  -> (H, S, S)
    ctx = jnp.arange(seq_len)[:, None]
    mem = jnp.arange(seq_len)[None, :]
    rel_pos = mem - ctx
    buckets = relative_position_bucket(rel_pos)            # (S, S)
    bias = rel_bias_table[buckets]                         # (S, S, H) gather (glue)
    return jnp.transpose(bias, (2, 0, 1)).astype(jnp.float32)


def init_params(key, vocab, d_model, d_kv, num_heads, d_ff, num_layers, num_labels):
    keys = jax.random.split(key, 4 + num_layers)
    s = 0.02
    lp = 128 * max(1, pl.cdiv(num_labels, 128))            # lane-dense padded label dim
    cls_w = jnp.zeros((d_model, lp), jnp.float32).at[:, :num_labels].set(
        jax.random.normal(keys[2], (d_model, num_labels), jnp.float32) * s)
    params = {
        'embed': jax.random.normal(keys[0], (vocab, d_model), jnp.float32) * s,
        'rel_bias': jax.random.normal(keys[1], (32, num_heads), jnp.float32) * s,
        'final_ln': jnp.ones((1, d_model), jnp.float32),
        'cls_w': cls_w,
        'cls_b': jnp.zeros((1, lp), jnp.float32),
        'layers': [],
    }
    for l in range(num_layers):
        lk = jax.random.split(keys[4 + l], 4)
        wqkv = jax.random.normal(lk[0], (3, num_heads, d_model, d_kv), jnp.float32) * s
        params['layers'].append({
            'ln1': jnp.ones((1, d_model), jnp.float32),
            'wqkv': wqkv.reshape(3 * num_heads, d_model, d_kv).astype(jnp.bfloat16),
            'wo': (jax.random.normal(lk[1], (num_heads, d_kv, d_model),
                                     jnp.float32) * s).astype(jnp.bfloat16),
            'ln2': jnp.ones((1, d_model), jnp.float32),
            'wi': (jax.random.normal(lk[2], (d_model, d_ff),
                                     jnp.float32) * s).astype(jnp.bfloat16),
            'wff_o': (jax.random.normal(lk[3], (d_ff, d_model),
                                        jnp.float32) * s).astype(jnp.bfloat16),
        })
    return params


def encoder_forward(params, input_ids, att_masks, num_heads, d_kv):
    B, S = input_ids.shape
    D = params['embed'].shape[1]
    M = B * S

    # token embedding (gather — glue); residual stream kept in f32
    x = params['embed'][input_ids].reshape(M, D)
    # TODO(synk): all dropouts (embedding/attention/ff/classifier) are identity at inference.

    # additive attention bias pieces, NOT broadcast to (B,H,S,S): combined per-tile in-kernel
    pos_bias = compute_position_bias(params['rel_bias'], S, num_heads)   # (H, S, S)
    mask_bias = ((1.0 - att_masks.astype(jnp.float32)) * -1e9).reshape(B, 1, S)

    for lp in params['layers']:
        # ---- self-attention block (fused RMSNorm+QKV, flash attn, head-reduce + residual) ----
        qkv = rms_qkv_proj(x, lp['ln1'], lp['wqkv'])            # (3H, M, Dk) bf16
        qkv5 = qkv.reshape(3, num_heads, B, S, d_kv)            # free view
        attn = flash_attention(qkv5, pos_bias, mask_bias)       # (H, B, S, Dk) bf16
        attn = attn.reshape(num_heads, M, d_kv)                 # free view (no transpose)
        x = attn_out_proj(attn, lp['wo'], x)                    # (M, D) f32, residual fused

        # ---- feed-forward block (RMSNorm + wi + ReLU + wo + residual fused, d_ff tiled) ----
        x = ffn_block(x, lp['ln2'], lp['wi'], lp['wff_o'])      # (M, D) f32

    return x.reshape(B, S, D)


@functools.partial(jax.jit, static_argnums=(3, 4, 5))
def base_model_nlp_forward(params, input_ids, att_masks, num_heads, d_kv, num_labels):
    hidden = encoder_forward(params, input_ids, att_masks, num_heads, d_kv)
    # final RMSNorm + mean pool over seq + classifier, fused in one Pallas kernel
    logits = pool_and_classify(hidden, params['final_ln'],
                               params['cls_w'], params['cls_b'], num_labels)
    return logits


# --------------------------------- main ---------------------------------

if __name__ == "__main__":
    # small, shape-consistent config (T5-3b scaled down)
    VOCAB, D_MODEL, D_KV, N_HEADS, D_FF, N_LAYERS, N_LABELS = 100, 32, 8, 4, 64, 2, 1
    B, S = 2, 8

    key = jax.random.PRNGKey(0)
    k_param, k_ids, k_mask = jax.random.split(key, 3)

    params = init_params(k_param, VOCAB, D_MODEL, D_KV, N_HEADS, D_FF, N_LAYERS, N_LABELS)
    input_ids = jax.random.randint(k_ids, (B, S), 0, VOCAB, dtype=jnp.int32)
    # simple ragged attention mask: second example has padding
    att_masks = jnp.array([[1, 1, 1, 1, 1, 1, 1, 1],
                           [1, 1, 1, 1, 1, 0, 0, 0]], dtype=jnp.int32)

    logits = base_model_nlp_forward(params, input_ids, att_masks, N_HEADS, D_KV, N_LABELS)
    jax.block_until_ready(logits)
    assert logits.shape == (B, N_LABELS) and logits.dtype == jnp.float32
    assert bool(jnp.all(jnp.isfinite(logits)))
    print("KERNEL_OK")
</pallas_src>

<mosaic_0001>
module attributes {stable_mosaic.version = 11 : i64} {
  func.func @_rms_qkv_kernel(%arg0: i32, %arg1: i32, %arg2: memref<16x32xf32, #tpu.memory_space<vmem>>, %arg3: memref<1x32xf32, #tpu.memory_space<vmem>>, %arg4: memref<1x32x8xbf16, #tpu.memory_space<vmem>>, %arg5: memref<1x16x8xbf16, #tpu.memory_space<vmem>>, %arg6: memref<16x32xbf16, #tpu.memory_space<vmem>>) attributes {dimension_semantics = [#tpu.dimension_semantics<parallel>, #tpu.dimension_semantics<arbitrary>], iteration_bounds = array<i64: 1, 12>, scalar_prefetch = 0 : i64, scratch_operands = 1 : i64, tpu.core_type = #tpu.core_type<tc>, window_params = [{transform_indices = @transform_0, window_bounds = array<i64: 16, 32>}, {pipeline_mode = #tpu.pipeline_mode<synchronous>, transform_indices = @transform_1, window_bounds = array<i64: 1, 32>}, {transform_indices = @transform_2, window_bounds = array<i64: 1, 32, 8>}, {transform_indices = @transform_3, window_bounds = array<i64: 1, 16, 8>}]} {
    %c0_i32 = arith.constant 0 : i32
    %0 = arith.cmpi eq, %arg1, %c0_i32 : i32
    %1 = arith.extui %0 : i1 to i32
    %c0_i32_0 = arith.constant 0 : i32
    %2 = arith.cmpi ne, %1, %c0_i32_0 : i32
    scf.if %2 {
      %c0_8 = arith.constant 0 : index
      %c0_9 = arith.constant 0 : index
      %11 = vector.load %arg2[%c0_8, %c0_9] : memref<16x32xf32, #tpu.memory_space<vmem>>, vector<16x32xf32>
      %12 = arith.mulf %11, %11 : vector<16x32xf32>
      %cst_10 = arith.constant dense<0.000000e+00> : vector<16xf32>
      %13 = vector.multi_reduction <add>, %12, %cst_10 [1] : vector<16x32xf32> to vector<16xf32>
      %14 = vector.shape_cast %13 : vector<16xf32> to vector<16x1xf32>
      %cst_11 = arith.constant 3.200000e+01 : f32
      %15 = vector.broadcast %cst_11 : f32 to vector<16x1xf32>
      %16 = arith.divf %14, %15 : vector<16x1xf32>
      %cst_12 = arith.constant 9.99999997E-7 : f32
      %17 = vector.broadcast %cst_12 : f32 to vector<16x1xf32>
      %18 = arith.addf %16, %17 : vector<16x1xf32>
      %19 = math.rsqrt %18 : vector<16x1xf32>
      %20 = vector.broadcast %19 : vector<16x1xf32> to vector<16x32xf32>
      %21 = arith.mulf %11, %20 : vector<16x32xf32>
      %c0_13 = arith.constant 0 : index
      %c0_14 = arith.constant 0 : index
      %22 = vector.load %arg3[%c0_13, %c0_14] : memref<1x32xf32, #tpu.memory_space<vmem>>, vector<1x32xf32>
      %23 = vector.broadcast %22 : vector<1x32xf32> to vector<16x32xf32>
      %24 = arith.mulf %21, %23 : vector<16x32xf32>
      %25 = arith.truncf %24 : vector<16x32xf32> to vector<16x32xbf16>
      %c0_15 = arith.constant 0 : index
      %c0_16 = arith.constant 0 : index
      %26 = vector.load %arg6[%c0_15, %c0_16] : memref<16x32xbf16, #tpu.memory_space<vmem>>, vector<16x32xbf16>
      tpu.vector_store %arg6[%c0_15, %c0_16], %25 {strides = array<i32>} : memref<16x32xbf16, #tpu.memory_space<vmem>>, vector<16x32xbf16>,
    } else {
    }
    %c0 = arith.constant 0 : index
    %c0_1 = arith.constant 0 : index
    %3 = vector.load %arg6[%c0, %c0_1] : memref<16x32xbf16, #tpu.memory_space<vmem>>, vector<16x32xbf16>
    %c0_2 = arith.constant 0 : index
    %c0_3 = arith.constant 0 : index
    %c0_4 = arith.constant 0 : index
    %4 = vector.load %arg4[%c0_2, %c0_3, %c0_4] : memref<1x32x8xbf16, #tpu.memory_space<vmem>>, vector<1x32x8xbf16>
    %5 = vector.shape_cast %4 : vector<1x32x8xbf16> to vector<32x8xbf16>
    %cst = arith.constant dense<0.000000e+00> : vector<16x8xf32>
    %6 = tpu.matmul %3, %5, %cst {dimension_numbers = #tpu.dot_dimension_numbers<[1], [0], [0], [1], [0, 0, 1, 1], [], []>} : vector<16x32xbf16>, vector<32x8xbf16>, vector<16x8xf32> -> vector<16x8xf32>
    %7 = arith.truncf %6 : vector<16x8xf32> to vector<16x8xbf16>
    %c0_5 = arith.constant 0 : index
    %c0_6 = arith.constant 0 : index
    %c0_7 = arith.constant 0 : index
    %8 = vector.load %arg5[%c0_5, %c0_6, %c0_7] : memref<1x16x8xbf16, #tpu.memory_space<vmem>>, vector<1x16x8xbf16>
    %9 = vector.shape_cast %8 : vector<1x16x8xbf16> to vector<16x8xbf16>
    %10 = vector.shape_cast %7 : vector<16x8xbf16> to vector<1x16x8xbf16>
    tpu.vector_store %arg5[%c0_5, %c0_6, %c0_7], %10 {strides = array<i32>} : memref<1x16x8xbf16, #tpu.memory_space<vmem>>, vector<1x16x8xbf16>,
    return
  }
  func.func @transform_0(%arg0: i32, %arg1: i32) -> (i32, i32) {
    %c0_i32 = arith.constant 0 : i32
    %c0_i32_0 = arith.constant 0 : i32
    return %arg0, %c0_i32 : i32, i32
  }
  func.func @transform_1(%arg0: i32, %arg1: i32) -> (i32, i32) {
    %c0_i32 = arith.constant 0 : i32
    %c0_i32_0 = arith.constant 0 : i32
    %c0_i32_1 = arith.constant 0 : i32
    return %c0_i32, %c0_i32_0 : i32, i32
  }
  func.func @transform_2(%arg0: i32, %arg1: i32) -> (i32, i32, i32) {
    %c0_i32 = arith.constant 0 : i32
    %c0_i32_0 = arith.constant 0 : i32
    %c0_i32_1 = arith.constant 0 : i32
    return %arg1, %c0_i32, %c0_i32_0 : i32, i32, i32
  }
  func.func @transform_3(%arg0: i32, %arg1: i32) -> (i32, i32, i32) {
    %c0_i32 = arith.constant 0 : i32
    %c0_i32_0 = arith.constant 0 : i32
    return %arg1, %arg0, %c0_i32 : i32, i32, i32
  }
}

module attributes {stable_mosaic.version = 11 : i64} {
  func.func @_attn_out_proj_kernel(%arg0: i32, %arg1: i32, %arg2: memref<1x16x8xbf16, #tpu.memory_space<vmem>>, %arg3: memref<1x8x32xbf16, #tpu.memory_space<vmem>>, %arg4: memref<16x32xf32, #tpu.memory_space<vmem>>, %arg5: memref<16x32xf32, #tpu.memory_space<vmem>>, %arg6: memref<16x32xf32, #tpu.memory_space<vmem>>) attributes {dimension_semantics = [#tpu.dimension_semantics<parallel>, #tpu.dimension_semantics<arbitrary>], iteration_bounds = array<i64: 1, 4>, scalar_prefetch = 0 : i64, scratch_operands = 1 : i64, tpu.core_type = #tpu.core_type<tc>, window_params = [{transform_indices = @transform_0, window_bounds = array<i64: 1, 16, 8>}, {transform_indices = @transform_1, window_bounds = array<i64: 1, 8, 32>}, {transform_indices = @transform_2, window_bounds = array<i64: 16, 32>}, {transform_indices = @transform_3, window_bounds = array<i64: 16, 32>}]} {
    %c0_i32 = arith.constant 0 : i32
    %0 = arith.cmpi eq, %arg1, %c0_i32 : i32
    %1 = arith.extui %0 : i1 to i32
    %c0_i32_0 = arith.constant 0 : i32
    %2 = arith.cmpi ne, %1, %c0_i32_0 : i32
    scf.if %2 {
      %cst_11 = arith.constant 0.000000e+00 : f32
      %14 = vector.broadcast %cst_11 : f32 to vector<16x32xf32>
      %c0_12 = arith.constant 0 : index
      %c0_13 = arith.constant 0 : index
      %15 = vector.load %arg6[%c0_12, %c0_13] : memref<16x32xf32, #tpu.memory_space<vmem>>, vector<16x32xf32>
      tpu.vector_store %arg6[%c0_12, %c0_13], %14 {strides = array<i32>} : memref<16x32xf32, #tpu.memory_space<vmem>>, vector<16x32xf32>,
    } else {
    }
    %c0 = arith.constant 0 : index
    %c0_1 = arith.constant 0 : index
    %3 = vector.load %arg6[%c0, %c0_1] : memref<16x32xf32, #tpu.memory_space<vmem>>, vector<16x32xf32>
    %c0_2 = arith.constant 0 : index
    %c0_3 = arith.constant 0 : index
    %c0_4 = arith.constant 0 : index
    %4 = vector.load %arg2[%c0_2, %c0_3, %c0_4] : memref<1x16x8xbf16, #tpu.memory_space<vmem>>, vector<1x16x8xbf16>
    %5 = vector.shape_cast %4 : vector<1x16x8xbf16> to vector<16x8xbf16>
    %c0_5 = arith.constant 0 : index
    %c0_6 = arith.constant 0 : index
    %c0_7 = arith.constant 0 : index
    %6 = vector.load %arg3[%c0_5, %c0_6, %c0_7] : memref<1x8x32xbf16, #tpu.memory_space<vmem>>, vector<1x8x32xbf16>
    %7 = vector.shape_cast %6 : vector<1x8x32xbf16> to vector<8x32xbf16>
    %cst = arith.constant dense<0.000000e+00> : vector<16x32xf32>
    %8 = tpu.matmul %5, %7, %cst {dimension_numbers = #tpu.dot_dimension_numbers<[1], [0], [0], [1], [0, 0, 1, 1], [], []>} : vector<16x8xbf16>, vector<8x32xbf16>, vector<16x32xf32> -> vector<16x32xf32>
    %9 = arith.addf %3, %8 : vector<16x32xf32>
    %c0_8 = arith.constant 0 : index
    %c0_9 = arith.constant 0 : index
    %10 = vector.load %arg6[%c0_8, %c0_9] : memref<16x32xf32, #tpu.memory_space<vmem>>, vector<16x32xf32>
    tpu.vector_store %arg6[%c0_8, %c0_9], %9 {strides = array<i32>} : memref<16x32xf32, #tpu.memory_space<vmem>>, vector<16x32xf32>,
    %c3_i32 = arith.constant 3 : i32
    %11 = arith.cmpi eq, %arg1, %c3_i32 : i32
    %12 = arith.extui %11 : i1 to i32
    %c0_i32_10 = arith.constant 0 : i32
    %13 = arith.cmpi ne, %12, %c0_i32_10 : i32
    scf.if %13 {
      %c0_11 = arith.constant 0 : index
      %c0_12 = arith.constant 0 : index
      %14 = vector.load %arg6[%c0_11, %c0_12] : memref<16x32xf32, #tpu.memory_space<vmem>>, vector<16x32xf32>
      %c0_13 = arith.constant 0 : index
      %c0_14 = arith.constant 0 : index
      %15 = vector.load %arg4[%c0_13, %c0_14] : memref<16x32xf32, #tpu.memory_space<vmem>>, vector<16x32xf32>
      %16 = arith.addf %14, %15 : vector<16x32xf32>
      %c0_15 = arith.constant 0 : index
      %c0_16 = arith.constant 0 : index
      %17 = vector.load %arg5[%c0_15, %c0_16] : memref<16x32xf32, #tpu.memory_space<vmem>>, vector<16x32xf32>
      tpu.vector_store %arg5[%c0_15, %c0_16], %16 {strides = array<i32>} : memref<16x32xf32, #tpu.memory_space<vmem>>, vector<16x32xf32>,
    } else {
    }
    return
  }
  func.func @transform_0(%arg0: i32, %arg1: i32) -> (i32, i32, i32) {
    %c0_i32 = arith.constant 0 : i32
    %c0_i32_0 = arith.constant 0 : i32
    return %arg1, %arg0, %c0_i32 : i32, i32, i32
  }
  func.func @transform_1(%arg0: i32, %arg1: i32) -> (i32, i32, i32) {
    %c0_i32 = arith.constant 0 : i32
    %c0_i32_0 = arith.constant 0 : i32
    %c0_i32_1 = arith.constant 0 : i32
    return %arg1, %c0_i32, %c0_i32_0 : i32, i32, i32
  }
  func.func @transform_2(%arg0: i32, %arg1: i32) -> (i32, i32) {
    %c0_i32 = arith.constant 0 : i32
    %c0_i32_0 = arith.constant 0 : i32
    return %arg0, %c0_i32 : i32, i32
  }
  func.func @transform_3(%arg0: i32, %arg1: i32) -> (i32, i32) {
    %c0_i32 = arith.constant 0 : i32
    %c0_i32_0 = arith.constant 0 : i32
    return %arg0, %c0_i32 : i32, i32
  }
}

module attributes {stable_mosaic.version = 11 : i64} {
  func.func @_flash_attn_kernel(%arg0: i32, %arg1: i32, %arg2: i32, %arg3: i32, %arg4: memref<1x1x1x8x8xbf16, #tpu.memory_space<vmem>>, %arg5: memref<1x1x1x8x8xbf16, #tpu.memory_space<vmem>>, %arg6: memref<1x1x1x8x8xbf16, #tpu.memory_space<vmem>>, %arg7: memref<1x8x8xf32, #tpu.memory_space<vmem>>, %arg8: memref<1x1x8xf32, #tpu.memory_space<vmem>>, %arg9: memref<1x1x8x8xbf16, #tpu.memory_space<vmem>>, %arg10: memref<8x1xf32, #tpu.memory_space<vmem>>, %arg11: memref<8x1xf32, #tpu.memory_space<vmem>>, %arg12: memref<8x8xf32, #tpu.memory_space<vmem>>) attributes {dimension_semantics = [#tpu.dimension_semantics<parallel>, #tpu.dimension_semantics<parallel>, #tpu.dimension_semantics<parallel>, #tpu.dimension_semantics<arbitrary>], iteration_bounds = array<i64: 4, 2, 1, 1>, scalar_prefetch = 0 : i64, scratch_operands = 3 : i64, tpu.core_type = #tpu.core_type<tc>, window_params = [{transform_indices = @transform_0, window_bounds = array<i64: 1, 1, 1, 8, 8>}, {transform_indices = @transform_1, window_bounds = array<i64: 1, 1, 1, 8, 8>}, {transform_indices = @transform_2, window_bounds = array<i64: 1, 1, 1, 8, 8>}, {transform_indices = @transform_3, window_bounds = array<i64: 1, 8, 8>}, {transform_indices = @transform_4, window_bounds = array<i64: 1, 1, 8>}, {transform_indices = @transform_5, window_bounds = array<i64: 1, 1, 8, 8>}]} {
    %c0_i32 = arith.constant 0 : i32
    %0 = arith.cmpi eq, %arg3, %c0_i32 : i32
    %1 = arith.extui %0 : i1 to i32
    %c0_i32_0 = arith.constant 0 : i32
    %2 = arith.cmpi ne, %1, %c0_i32_0 : i32
    scf.if %2 {
      %cst_38 = arith.constant 0xFF800000 : f32
      %43 = vector.broadcast %cst_38 : f32 to vector<8x1xf32>
      %c0_39 = arith.constant 0 : index
      %c0_40 = arith.constant 0 : index
      %44 = vector.load %arg10[%c0_39, %c0_40] : memref<8x1xf32, #tpu.memory_space<vmem>>, vector<8x1xf32>
      tpu.vector_store %arg10[%c0_39, %c0_40], %43 {strides = array<i32>} : memref<8x1xf32, #tpu.memory_space<vmem>>, vector<8x1xf32>,
      %cst_41 = arith.constant 0.000000e+00 : f32
      %45 = vector.broadcast %cst_41 : f32 to vector<8x1xf32>
      %c0_42 = arith.constant 0 : index
      %c0_43 = arith.constant 0 : index
      %46 = vector.load %arg11[%c0_42, %c0_43] : memref<8x1xf32, #tpu.memory_space<vmem>>, vector<8x1xf32>
      tpu.vector_store %arg11[%c0_42, %c0_43], %45 {strides = array<i32>} : memref<8x1xf32, #tpu.memory_space<vmem>>, vector<8x1xf32>,
      %cst_44 = arith.constant 0.000000e+00 : f32
      %47 = vector.broadcast %cst_44 : f32 to vector<8x8xf32>
      %c0_45 = arith.constant 0 : index
      %c0_46 = arith.constant 0 : index
      %48 = vector.load %arg12[%c0_45, %c0_46] : memref<8x8xf32, #tpu.memory_space<vmem>>, vector<8x8xf32>
      tpu.vector_store %arg12[%c0_45, %c0_46], %47 {strides = array<i32>} : memref<8x8xf32, #tpu.memory_space<vmem>>, vector<8x8xf32>,
    } else {
    }
    %c0 = arith.constant 0 : index
    %c0_1 = arith.constant 0 : index
    %c0_2 = arith.constant 0 : index
    %c0_3 = arith.constant 0 : index
    %c0_4 = arith.constant 0 : index
    %3 = vector.load %arg4[%c0, %c0_1, %c0_2, %c0_3, %c0_4] : memref<1x1x1x8x8xbf16, #tpu.memory_space<vmem>>, vector<1x1x1x8x8xbf16>
    %4 = vector.shape_cast %3 : vector<1x1x1x8x8xbf16> to vector<8x8xbf16>
    %c0_5 = arith.constant 0 : index
    %c0_6 = arith.constant 0 : index
    %c0_7 = arith.constant 0 : index
    %c0_8 = arith.constant 0 : index
    %c0_9 = arith.constant 0 : index
    %5 = vector.load %arg5[%c0_5, %c0_6, %c0_7, %c0_8, %c0_9] : memref<1x1x1x8x8xbf16, #tpu.memory_space<vmem>>, vector<1x1x1x8x8xbf16>
    %6 = vector.shape_cast %5 : vector<1x1x1x8x8xbf16> to vector<8x8xbf16>
    %cst = arith.constant dense<0.000000e+00> : vector<8x8xf32>
    %7 = tpu.matmul %4, %6, %cst {dimension_numbers = #tpu.dot_dimension_numbers<[1], [1], [0], [0], [0, 0, 1, 0], [], []>} : vector<8x8xbf16>, vector<8x8xbf16>, vector<8x8xf32> -> vector<8x8xf32>
    %c0_10 = arith.constant 0 : index
    %c0_11 = arith.constant 0 : index
    %c0_12 = arith.constant 0 : index
    %8 = vector.load %arg7[%c0_10, %c0_11, %c0_12] : memref<1x8x8xf32, #tpu.memory_space<vmem>>, vector<1x8x8xf32>
    %9 = vector.shape_cast %8 : vector<1x8x8xf32> to vector<8x8xf32>
    %10 = arith.addf %7, %9 : vector<8x8xf32>
    %c0_13 = arith.constant 0 : index
    %c0_14 = arith.constant 0 : index
    %c0_15 = arith.constant 0 : index
    %11 = vector.load %arg8[%c0_13, %c0_14, %c0_15] : memref<1x1x8xf32, #tpu.memory_space<vmem>>, vector<1x1x8xf32>
    %12 = vector.shape_cast %11 : vector<1x1x8xf32> to vector<1x8xf32>
    %13 = vector.broadcast %12 : vector<1x8xf32> to vector<8x8xf32>
    %14 = arith.addf %10, %13 : vector<8x8xf32>
    %c0_16 = arith.constant 0 : index
    %c0_17 = arith.constant 0 : index
    %15 = vector.load %arg10[%c0_16, %c0_17] : memref<8x1xf32, #tpu.memory_space<vmem>>, vector<8x1xf32>
    %cst_18 = arith.constant dense<0xFF800000> : vector<8xf32>
    %16 = vector.multi_reduction <maximumf>, %14, %cst_18 [1] : vector<8x8xf32> to vector<8xf32>
    %17 = vector.shape_cast %16 : vector<8xf32> to vector<8x1xf32>
    %18 = arith.maximumf %15, %17 : vector<8x1xf32>
    %19 = arith.subf %15, %18 : vector<8x1xf32>
    %20 = math.exp %19 : vector<8x1xf32>
    %21 = vector.broadcast %18 : vector<8x1xf32> to vector<8x8xf32>
    %22 = arith.subf %14, %21 : vector<8x8xf32>
    %23 = math.exp %22 : vector<8x8xf32>
    %c0_19 = arith.constant 0 : index
    %c0_20 = arith.constant 0 : index
    %24 = vector.load %arg11[%c0_19, %c0_20] : memref<8x1xf32, #tpu.memory_space<vmem>>, vector<8x1xf32>
    %25 = arith.mulf %20, %24 : vector<8x1xf32>
    %cst_21 = arith.constant dense<0.000000e+00> : vector<8xf32>
    %26 = vector.multi_reduction <add>, %23, %cst_21 [1] : vector<8x8xf32> to vector<8xf32>
    %27 = vector.shape_cast %26 : vector<8xf32> to vector<8x1xf32>
    %28 = arith.addf %25, %27 : vector<8x1xf32>
    %c0_22 = arith.constant 0 : index
    %c0_23 = arith.constant 0 : index
    %29 = vector.load %arg11[%c0_22, %c0_23] : memref<8x1xf32, #tpu.memory_space<vmem>>, vector<8x1xf32>
    tpu.vector_store %arg11[%c0_22, %c0_23], %28 {strides = array<i32>} : memref<8x1xf32, #tpu.memory_space<vmem>>, vector<8x1xf32>,
    %c0_24 = arith.constant 0 : index
    %c0_25 = arith.constant 0 : index
    %30 = vector.load %arg12[%c0_24, %c0_25] : memref<8x8xf32, #tpu.memory_space<vmem>>, vector<8x8xf32>
    %31 = vector.broadcast %20 : vector<8x1xf32> to vector<8x8xf32>
    %32 = arith.mulf %31, %30 : vector<8x8xf32>
    %33 = arith.truncf %23 : vector<8x8xf32> to vector<8x8xbf16>
    %c0_26 = arith.constant 0 : index
    %c0_27 = arith.constant 0 : index
    %c0_28 = arith.constant 0 : index
    %c0_29 = arith.constant 0 : index
    %c0_30 = arith.constant 0 : index
    %34 = vector.load %arg6[%c0_26, %c0_27, %c0_28, %c0_29, %c0_30] : memref<1x1x1x8x8xbf16, #tpu.memory_space<vmem>>, vector<1x1x1x8x8xbf16>
    %35 = vector.shape_cast %34 : vector<1x1x1x8x8xbf16> to vector<8x8xbf16>
    %cst_31 = arith.constant dense<0.000000e+00> : vector<8x8xf32>
    %36 = tpu.matmul %33, %35, %cst_31 {dimension_numbers = #tpu.dot_dimension_numbers<[1], [0], [0], [1], [0, 0, 1, 1], [], []>} : vector<8x8xbf16>, vector<8x8xbf16>, vector<8x8xf32> -> vector<8x8xf32>
    %37 = arith.addf %32, %36 : vector<8x8xf32>
    %c0_32 = arith.constant 0 : index
    %c0_33 = arith.constant 0 : index
    %38 = vector.load %arg12[%c0_32, %c0_33] : memref<8x8xf32, #tpu.memory_space<vmem>>, vector<8x8xf32>
    tpu.vector_store %arg12[%c0_32, %c0_33], %37 {strides = array<i32>} : memref<8x8xf32, #tpu.memory_space<vmem>>, vector<8x8xf32>,
    %c0_34 = arith.constant 0 : index
    %c0_35 = arith.constant 0 : index
    %39 = vector.load %arg10[%c0_34, %c0_35] : memref<8x1xf32, #tpu.memory_space<vmem>>, vector<8x1xf32>
    tpu.vector_store %arg10[%c0_34, %c0_35], %18 {strides = array<i32>} : memref<8x1xf32, #tpu.memory_space<vmem>>, vector<8x1xf32>,
    %c0_i32_36 = arith.constant 0 : i32
    %40 = arith.cmpi eq, %arg3, %c0_i32_36 : i32
    %41 = arith.extui %40 : i1 to i32
    %c0_i32_37 = arith.constant 0 : i32
    %42 = arith.cmpi ne, %41, %c0_i32_37 : i32
    scf.if %42 {
      %c0_38 = arith.constant 0 : index
      %c0_39 = arith.constant 0 : index
      %43 = vector.load %arg12[%c0_38, %c0_39] : memref<8x8xf32, #tpu.memory_space<vmem>>, vector<8x8xf32>
      %c0_40 = arith.constant 0 : index
      %c0_41 = arith.constant 0 : index
      %44 = vector.load %arg11[%c0_40, %c0_41] : memref<8x1xf32, #tpu.memory_space<vmem>>, vector<8x1xf32>
      %45 = tpu.reciprocal %44 {approx = true} : vector<8x1xf32> -> vector<8x1xf32>
      %46 = vector.broadcast %45 : vector<8x1xf32> to vector<8x8xf32>
      %47 = arith.mulf %43, %46 : vector<8x8xf32>
      %48 = arith.truncf %47 : vector<8x8xf32> to vector<8x8xbf16>
      %c0_42 = arith.constant 0 : index
      %c0_43 = arith.constant 0 : index
      %c0_44 = arith.constant 0 : index
      %c0_45 = arith.constant 0 : index
      %49 = vector.load %arg9[%c0_42, %c0_43, %c0_44, %c0_45] : memref<1x1x8x8xbf16, #tpu.memory_space<vmem>>, vector<1x1x8x8xbf16>
      %50 = vector.shape_cast %49 : vector<1x1x8x8xbf16> to vector<8x8xbf16>
      %51 = vector.shape_cast %48 : vector<8x8xbf16> to vector<1x1x8x8xbf16>
      tpu.vector_store %arg9[%c0_42, %c0_43, %c0_44, %c0_45], %51 {strides = array<i32>} : memref<1x1x8x8xbf16, #tpu.memory_space<vmem>>, vector<1x1x8x8xbf16>,
    } else {
    }
    return
  }
  func.func @transform_0(%arg0: i32, %arg1: i32, %arg2: i32, %arg3: i32) -> (i32, i32, i32, i32, i32) {
    %c0_i32 = arith.constant 0 : i32
    %c0_i32_0 = arith.constant 0 : i32
    %c0_i32_1 = arith.constant 0 : i32
    return %c0_i32, %arg0, %arg1, %arg2, %c0_i32_0 : i32, i32, i32, i32, i32
  }
  func.func @transform_1(%arg0: i32, %arg1: i32, %arg2: i32, %arg3: i32) -> (i32, i32, i32, i32, i32) {
    %c1_i32 = arith.constant 1 : i32
    %c0_i32 = arith.constant 0 : i32
    %c0_i32_0 = arith.constant 0 : i32
    return %c1_i32, %arg0, %arg1, %arg3, %c0_i32 : i32, i32, i32, i32, i32
  }
  func.func @transform_2(%arg0: i32, %arg1: i32, %arg2: i32, %arg3: i32) -> (i32, i32, i32, i32, i32) {
    %c2_i32 = arith.constant 2 : i32
    %c0_i32 = arith.constant 0 : i32
    %c0_i32_0 = arith.constant 0 : i32
    return %c2_i32, %arg0, %arg1, %arg3, %c0_i32 : i32, i32, i32, i32, i32
  }
  func.func @transform_3(%arg0: i32, %arg1: i32, %arg2: i32, %arg3: i32) -> (i32, i32, i32) {
    %c0_i32 = arith.constant 0 : i32
    return %arg0, %arg2, %arg3 : i32, i32, i32
  }
  func.func @transform_4(%arg0: i32, %arg1: i32, %arg2: i32, %arg3: i32) -> (i32, i32, i32) {
    %c0_i32 = arith.constant 0 : i32
    %c0_i32_0 = arith.constant 0 : i32
    return %arg1, %c0_i32, %arg3 : i32, i32, i32
  }
  func.func @transform_5(%arg0: i32, %arg1: i32, %arg2: i32, %arg3: i32) -> (i32, i32, i32, i32) {
    %c0_i32 = arith.constant 0 : i32
    %c0_i32_0 = arith.constant 0 : i32
    return %arg0, %arg1, %arg2, %c0_i32 : i32, i32, i32, i32
  }
}

module attributes {stable_mosaic.version = 11 : i64} {
  func.func @_ffn_kernel(%arg0: i32, %arg1: i32, %arg2: memref<16x32xf32, #tpu.memory_space<vmem>>, %arg3: memref<1x32xf32, #tpu.memory_space<vmem>>, %arg4: memref<32x64xbf16, #tpu.memory_space<vmem>>, %arg5: memref<64x32xbf16, #tpu.memory_space<vmem>>, %arg6: memref<16x32xf32, #tpu.memory_space<vmem>>, %arg7: memref<16x32xbf16, #tpu.memory_space<vmem>>, %arg8: memref<16x32xf32, #tpu.memory_space<vmem>>) attributes {dimension_semantics = [#tpu.dimension_semantics<parallel>, #tpu.dimension_semantics<arbitrary>], iteration_bounds = array<i64: 1, 1>, scalar_prefetch = 0 : i64, scratch_operands = 2 : i64, tpu.core_type = #tpu.core_type<tc>, window_params = [{transform_indices = @transform_0, window_bounds = array<i64: 16, 32>}, {pipeline_mode = #tpu.pipeline_mode<synchronous>, transform_indices = @transform_1, window_bounds = array<i64: 1, 32>}, {transform_indices = @transform_2, window_bounds = array<i64: 32, 64>}, {transform_indices = @transform_3, window_bounds = array<i64: 64, 32>}, {transform_indices = @transform_4, window_bounds = array<i64: 16, 32>}]} {
    %c0_i32 = arith.constant 0 : i32
    %0 = arith.cmpi eq, %arg1, %c0_i32 : i32
    %1 = arith.extui %0 : i1 to i32
    %c0_i32_0 = arith.constant 0 : i32
    %2 = arith.cmpi ne, %1, %c0_i32_0 : i32
    scf.if %2 {
      %c0_14 = arith.constant 0 : index
      %c0_15 = arith.constant 0 : index
      %17 = vector.load %arg2[%c0_14, %c0_15] : memref<16x32xf32, #tpu.memory_space<vmem>>, vector<16x32xf32>
      %18 = arith.mulf %17, %17 : vector<16x32xf32>
      %cst_16 = arith.constant dense<0.000000e+00> : vector<16xf32>
      %19 = vector.multi_reduction <add>, %18, %cst_16 [1] : vector<16x32xf32> to vector<16xf32>
      %20 = vector.shape_cast %19 : vector<16xf32> to vector<16x1xf32>
      %cst_17 = arith.constant 3.200000e+01 : f32
      %21 = vector.broadcast %cst_17 : f32 to vector<16x1xf32>
      %22 = arith.divf %20, %21 : vector<16x1xf32>
      %cst_18 = arith.constant 9.99999997E-7 : f32
      %23 = vector.broadcast %cst_18 : f32 to vector<16x1xf32>
      %24 = arith.addf %22, %23 : vector<16x1xf32>
      %25 = math.rsqrt %24 : vector<16x1xf32>
      %26 = vector.broadcast %25 : vector<16x1xf32> to vector<16x32xf32>
      %27 = arith.mulf %17, %26 : vector<16x32xf32>
      %c0_19 = arith.constant 0 : index
      %c0_20 = arith.constant 0 : index
      %28 = vector.load %arg3[%c0_19, %c0_20] : memref<1x32xf32, #tpu.memory_space<vmem>>, vector<1x32xf32>
      %29 = vector.broadcast %28 : vector<1x32xf32> to vector<16x32xf32>
      %30 = arith.mulf %27, %29 : vector<16x32xf32>
      %31 = arith.truncf %30 : vector<16x32xf32> to vector<16x32xbf16>
      %c0_21 = arith.constant 0 : index
      %c0_22 = arith.constant 0 : index
      %32 = vector.load %arg7[%c0_21, %c0_22] : memref<16x32xbf16, #tpu.memory_space<vmem>>, vector<16x32xbf16>
      tpu.vector_store %arg7[%c0_21, %c0_22], %31 {strides = array<i32>} : memref<16x32xbf16, #tpu.memory_space<vmem>>, vector<16x32xbf16>,
      %cst_23 = arith.constant 0.000000e+00 : f32
      %33 = vector.broadcast %cst_23 : f32 to vector<16x32xf32>
      %c0_24 = arith.constant 0 : index
      %c0_25 = arith.constant 0 : index
      %34 = vector.load %arg8[%c0_24, %c0_25] : memref<16x32xf32, #tpu.memory_space<vmem>>, vector<16x32xf32>
      tpu.vector_store %arg8[%c0_24, %c0_25], %33 {strides = array<i32>} : memref<16x32xf32, #tpu.memory_space<vmem>>, vector<16x32xf32>,
    } else {
    }
    %c0 = arith.constant 0 : index
    %c0_1 = arith.constant 0 : index
    %3 = vector.load %arg7[%c0, %c0_1] : memref<16x32xbf16, #tpu.memory_space<vmem>>, vector<16x32xbf16>
    %c0_2 = arith.constant 0 : index
    %c0_3 = arith.constant 0 : index
    %4 = vector.load %arg4[%c0_2, %c0_3] : memref<32x64xbf16, #tpu.memory_space<vmem>>, vector<32x64xbf16>
    %cst = arith.constant dense<0.000000e+00> : vector<16x64xf32>
    %5 = tpu.matmul %3, %4, %cst {dimension_numbers = #tpu.dot_dimension_numbers<[1], [0], [0], [1], [0, 0, 1, 1], [], []>} : vector<16x32xbf16>, vector<32x64xbf16>, vector<16x64xf32> -> vector<16x64xf32>
    %cst_4 = arith.constant 0.000000e+00 : f32
    %6 = vector.broadcast %cst_4 : f32 to vector<16x64xf32>
    %7 = arith.maximumf %5, %6 : vector<16x64xf32>
    %8 = arith.truncf %7 : vector<16x64xf32> to vector<16x64xbf16>
    %c0_5 = arith.constant 0 : index
    %c0_6 = arith.constant 0 : index
    %9 = vector.load %arg8[%c0_5, %c0_6] : memref<16x32xf32, #tpu.memory_space<vmem>>, vector<16x32xf32>
    %c0_7 = arith.constant 0 : index
    %c0_8 = arith.constant 0 : index
    %10 = vector.load %arg5[%c0_7, %c0_8] : memref<64x32xbf16, #tpu.memory_space<vmem>>, vector<64x32xbf16>
    %cst_9 = arith.constant dense<0.000000e+00> : vector<16x32xf32>
    %11 = tpu.matmul %8, %10, %cst_9 {dimension_numbers = #tpu.dot_dimension_numbers<[1], [0], [0], [1], [0, 0, 1, 1], [], []>} : vector<16x64xbf16>, vector<64x32xbf16>, vector<16x32xf32> -> vector<16x32xf32>
    %12 = arith.addf %9, %11 : vector<16x32xf32>
    %c0_10 = arith.constant 0 : index
    %c0_11 = arith.constant 0 : index
    %13 = vector.load %arg8[%c0_10, %c0_11] : memref<16x32xf32, #tpu.memory_space<vmem>>, vector<16x32xf32>
    tpu.vector_store %arg8[%c0_10, %c0_11], %12 {strides = array<i32>} : memref<16x32xf32, #tpu.memory_space<vmem>>, vector<16x32xf32>,
    %c0_i32_12 = arith.constant 0 : i32
    %14 = arith.cmpi eq, %arg1, %c0_i32_12 : i32
    %15 = arith.extui %14 : i1 to i32
    %c0_i32_13 = arith.constant 0 : i32
    %16 = arith.cmpi ne, %15, %c0_i32_13 : i32
    scf.if %16 {
      %c0_14 = arith.constant 0 : index
      %c0_15 = arith.constant 0 : index
      %17 = vector.load %arg8[%c0_14, %c0_15] : memref<16x32xf32, #tpu.memory_space<vmem>>, vector<16x32xf32>
      %c0_16 = arith.constant 0 : index
      %c0_17 = arith.constant 0 : index
      %18 = vector.load %arg2[%c0_16, %c0_17] : memref<16x32xf32, #tpu.memory_space<vmem>>, vector<16x32xf32>
      %19 = arith.addf %17, %18 : vector<16x32xf32>
      %c0_18 = arith.constant 0 : index
      %c0_19 = arith.constant 0 : index
      %20 = vector.load %arg6[%c0_18, %c0_19] : memref<16x32xf32, #tpu.memory_space<vmem>>, vector<16x32xf32>
      tpu.vector_store %arg6[%c0_18, %c0_19], %19 {strides = array<i32>} : memref<16x32xf32, #tpu.memory_space<vmem>>, vector<16x32xf32>,
    } else {
    }
    return
  }
  func.func @transform_0(%arg0: i32, %arg1: i32) -> (i32, i32) {
    %c0_i32 = arith.constant 0 : i32
    %c0_i32_0 = arith.constant 0 : i32
    return %arg0, %c0_i32 : i32, i32
  }
  func.func @transform_1(%arg0: i32, %arg1: i32) -> (i32, i32) {
    %c0_i32 = arith.constant 0 : i32
    %c0_i32_0 = arith.constant 0 : i32
    %c0_i32_1 = arith.constant 0 : i32
    return %c0_i32, %c0_i32_0 : i32, i32
  }
  func.func @transform_2(%arg0: i32, %arg1: i32) -> (i32, i32) {
    %c0_i32 = arith.constant 0 : i32
    %c0_i32_0 = arith.constant 0 : i32
    return %c0_i32, %arg1 : i32, i32
  }
  func.func @transform_3(%arg0: i32, %arg1: i32) -> (i32, i32) {
    %c0_i32 = arith.constant 0 : i32
    %c0_i32_0 = arith.constant 0 : i32
    return %arg1, %c0_i32 : i32, i32
  }
  func.func @transform_4(%arg0: i32, %arg1: i32) -> (i32, i32) {
    %c0_i32 = arith.constant 0 : i32
    %c0_i32_0 = arith.constant 0 : i32
    return %arg0, %c0_i32 : i32, i32
  }
}

module attributes {stable_mosaic.version = 11 : i64} {
  func.func @_pool_cls_kernel(%arg0: i32, %arg1: memref<2x8x32xf32, #tpu.memory_space<vmem>>, %arg2: memref<1x32xf32, #tpu.memory_space<vmem>>, %arg3: memref<32x128xf32, #tpu.memory_space<vmem>>, %arg4: memref<1x128xf32, #tpu.memory_space<vmem>>, %arg5: memref<2x128xf32, #tpu.memory_space<vmem>>, %arg6: memref<2x32xf32, #tpu.memory_space<vmem>>) attributes {dimension_semantics = [#tpu.dimension_semantics<arbitrary>], iteration_bounds = array<i64: 1>, scalar_prefetch = 0 : i64, scratch_operands = 1 : i64, tpu.core_type = #tpu.core_type<tc>, window_params = [{transform_indices = @transform_0, window_bounds = array<i64: 2, 8, 32>}, {pipeline_mode = #tpu.pipeline_mode<synchronous>, transform_indices = @transform_1, window_bounds = array<i64: 1, 32>}, {pipeline_mode = #tpu.pipeline_mode<synchronous>, transform_indices = @transform_2, window_bounds = array<i64: 32, 128>}, {pipeline_mode = #tpu.pipeline_mode<synchronous>, transform_indices = @transform_3, window_bounds = array<i64: 1, 128>}, {pipeline_mode = #tpu.pipeline_mode<synchronous>, transform_indices = @transform_4, window_bounds = array<i64: 2, 128>}]} {
    %c0_i32 = arith.constant 0 : i32
    %0 = arith.cmpi eq, %arg0, %c0_i32 : i32
    %1 = arith.extui %0 : i1 to i32
    %c0_i32_0 = arith.constant 0 : i32
    %2 = arith.cmpi ne, %1, %c0_i32_0 : i32
    scf.if %2 {
      %cst_14 = arith.constant 0.000000e+00 : f32
      %25 = vector.broadcast %cst_14 : f32 to vector<2x32xf32>
      %c0_15 = arith.constant 0 : index
      %c0_16 = arith.constant 0 : index
      %26 = vector.load %arg6[%c0_15, %c0_16] : memref<2x32xf32, #tpu.memory_space<vmem>>, vector<2x32xf32>
      tpu.vector_store %arg6[%c0_15, %c0_16], %25 {strides = array<i32>} : memref<2x32xf32, #tpu.memory_space<vmem>>, vector<2x32xf32>,
    } else {
    }
    %c0 = arith.constant 0 : index
    %c0_1 = arith.constant 0 : index
    %c0_2 = arith.constant 0 : index
    %3 = vector.load %arg1[%c0, %c0_1, %c0_2] : memref<2x8x32xf32, #tpu.memory_space<vmem>>, vector<2x8x32xf32>
    %4 = arith.mulf %3, %3 : vector<2x8x32xf32>
    %cst = arith.constant dense<0.000000e+00> : vector<2x8xf32>
    %5 = vector.multi_reduction <add>, %4, %cst [2] : vector<2x8x32xf32> to vector<2x8xf32>
    %6 = vector.shape_cast %5 : vector<2x8xf32> to vector<2x8x1xf32>
    %cst_3 = arith.constant 3.200000e+01 : f32
    %7 = vector.broadcast %cst_3 : f32 to vector<2x8x1xf32>
    %8 = arith.divf %6, %7 : vector<2x8x1xf32>
    %cst_4 = arith.constant 9.99999997E-7 : f32
    %9 = vector.broadcast %cst_4 : f32 to vector<2x8x1xf32>
    %10 = arith.addf %8, %9 : vector<2x8x1xf32>
    %11 = math.rsqrt %10 : vector<2x8x1xf32>
    %12 = vector.broadcast %11 : vector<2x8x1xf32> to vector<2x8x32xf32>
    %13 = arith.mulf %3, %12 : vector<2x8x32xf32>
    %c0_5 = arith.constant 0 : index
    %c0_6 = arith.constant 0 : index
    %14 = vector.load %arg2[%c0_5, %c0_6] : memref<1x32xf32, #tpu.memory_space<vmem>>, vector<1x32xf32>
    %15 = vector.shape_cast %14 : vector<1x32xf32> to vector<1x1x32xf32>
    %16 = vector.broadcast %15 : vector<1x1x32xf32> to vector<2x8x32xf32>
    %17 = arith.mulf %13, %16 : vector<2x8x32xf32>
    %c0_7 = arith.constant 0 : index
    %c0_8 = arith.constant 0 : index
    %18 = vector.load %arg6[%c0_7, %c0_8] : memref<2x32xf32, #tpu.memory_space<vmem>>, vector<2x32xf32>
    %cst_9 = arith.constant dense<0.000000e+00> : vector<2x32xf32>
    %19 = vector.multi_reduction <add>, %17, %cst_9 [1] : vector<2x8x32xf32> to vector<2x32xf32>
    %20 = arith.addf %18, %19 : vector<2x32xf32>
    %c0_10 = arith.constant 0 : index
    %c0_11 = arith.constant 0 : index
    %21 = vector.load %arg6[%c0_10, %c0_11] : memref<2x32xf32, #tpu.memory_space<vmem>>, vector<2x32xf32>
    tpu.vector_store %arg6[%c0_10, %c0_11], %20 {strides = array<i32>} : memref<2x32xf32, #tpu.memory_space<vmem>>, vector<2x32xf32>,
    %c0_i32_12 = arith.constant 0 : i32
    %22 = arith.cmpi eq, %arg0, %c0_i32_12 : i32
    %23 = arith.extui %22 : i1 to i32
    %c0_i32_13 = arith.constant 0 : i32
    %24 = arith.cmpi ne, %23, %c0_i32_13 : i32
    scf.if %24 {
      %c0_14 = arith.constant 0 : index
      %c0_15 = arith.constant 0 : index
      %25 = vector.load %arg6[%c0_14, %c0_15] : memref<2x32xf32, #tpu.memory_space<vmem>>, vector<2x32xf32>
      %cst_16 = arith.constant 1.250000e-01 : f32
      %26 = vector.broadcast %cst_16 : f32 to vector<2x32xf32>
      %27 = arith.mulf %25, %26 : vector<2x32xf32>
      %c0_17 = arith.constant 0 : index
      %c0_18 = arith.constant 0 : index
      %28 = vector.load %arg3[%c0_17, %c0_18] : memref<32x128xf32, #tpu.memory_space<vmem>>, vector<32x128xf32>
      %cst_19 = arith.constant dense<0.000000e+00> : vector<2x128xf32>
      %29 = tpu.matmul %27, %28, %cst_19 {dimension_numbers = #tpu.dot_dimension_numbers<[1], [0], [0], [1], [0, 0, 1, 1], [], []>} : vector<2x32xf32>, vector<32x128xf32>, vector<2x128xf32> -> vector<2x128xf32>
      %c0_20 = arith.constant 0 : index
      %c0_21 = arith.constant 0 : index
      %30 = vector.load %arg4[%c0_20, %c0_21] : memref<1x128xf32, #tpu.memory_space<vmem>>, vector<1x128xf32>
      %31 = vector.broadcast %30 : vector<1x128xf32> to vector<2x128xf32>
      %32 = arith.addf %29, %31 : vector<2x128xf32>
      %c0_22 = arith.constant 0 : index
      %c0_23 = arith.constant 0 : index
      %33 = vector.load %arg5[%c0_22, %c0_23] : memref<2x128xf32, #tpu.memory_space<vmem>>, vector<2x128xf32>
      tpu.vector_store %arg5[%c0_22, %c0_23], %32 {strides = array<i32>} : memref<2x128xf32, #tpu.memory_space<vmem>>, vector<2x128xf32>,
    } else {
    }
    return
  }
  func.func @transform_0(%arg0: i32) -> (i32, i32, i32) {
    %c0_i32 = arith.constant 0 : i32
    %c0_i32_0 = arith.constant 0 : i32
    %c0_i32_1 = arith.constant 0 : i32
    return %c0_i32, %arg0, %c0_i32_0 : i32, i32, i32
  }
  func.func @transform_1(%arg0: i32) -> (i32, i32) {
    %c0_i32 = arith.constant 0 : i32
    %c0_i32_0 = arith.constant 0 : i32
    %c0_i32_1 = arith.constant 0 : i32
    return %c0_i32, %c0_i32_0 : i32, i32
  }
  func.func @transform_2(%arg0: i32) -> (i32, i32) {
    %c0_i32 = arith.constant 0 : i32
    %c0_i32_0 = arith.constant 0 : i32
    %c0_i32_1 = arith.constant 0 : i32
    return %c0_i32, %c0_i32_0 : i32, i32
  }
  func.func @transform_3(%arg0: i32) -> (i32, i32) {
    %c0_i32 = arith.constant 0 : i32
    %c0_i32_0 = arith.constant 0 : i32
    %c0_i32_1 = arith.constant 0 : i32
    return %c0_i32, %c0_i32_0 : i32, i32
  }
  func.func @transform_4(%arg0: i32) -> (i32, i32) {
    %c0_i32 = arith.constant 0 : i32
    %c0_i32_0 = arith.constant 0 : i32
    %c0_i32_1 = arith.constant 0 : i32
    return %c0_i32, %c0_i32_0 : i32, i32
  }
}

</mosaic_0001>

<llo_original>
// kernel: base_model_nlp_forward.11
$region0: #{base_model_nlp_forward.11}
  #allocation0 [shape = 'u32[]', space=smem, size = 0x4, offset = 0x4, fixed_abs, tag = 'smem constant byte address 0x4 - core index']
  #allocation1 [shape = 'u32[144,128]{1,0:T(1,128)}', space=vmem, size = 0x12000, scoped, tag = 'internal scratch']
  #allocation2 [shape = 'f32[16,32]{1,0:T(8,128)}', space=vmem, size = 0x2000, scoped, tag = 'scratch operand']
  %s0 = inlined_call_operand.hbm [shape: bf16[4,16,8], index: 0, kind: input, shape index: {}]
  %s1 = inlined_call_operand.hbm [shape: bf16[4,8,32], index: 1, kind: input, shape index: {}]
  %s2 = inlined_call_operand.hbm [shape: f32[16,32], index: 2, kind: input, shape index: {}]
  %s3 = inlined_call_operand.hbm [shape: f32[16,32], index: 3, kind: output, shape index: {}]
  %s4 = sld [smem:[#allocation0]]
  $region65: #{base_model_nlp_forward.11} parent=0
    _
  %s6 = ssub.s32 1, %s4
  %s7 = scalar_select 0, %s6, %s4
  $region1: #{base_model_nlp_forward.11} parent=0
    #allocation3 [shape = 'u8[8192]{0}', space=vmem, size = 0x2000, scoped, tag = 'input window, operand 0']
    #allocation4 [shape = 's32[2]{0}', space=sflag, size = 0x8, scoped, tag = 'scoped memory for base_model_nlp_forward.11']
    #allocation5 [shape = 's32[2]{0}', space=sflag, size = 0x8, scoped, tag = 'scoped memory for base_model_nlp_forward.11']
    #allocation6 [shape = 'u8[4096]{0}', space=vmem, size = 0x1000, scoped, tag = 'input window, operand 1']
    #allocation7 [shape = 's32[2]{0}', space=sflag, size = 0x8, scoped, tag = 'scoped memory for base_model_nlp_forward.11']
    #allocation8 [shape = 'u8[8192]{0}', space=vmem, size = 0x2000, scoped, tag = 'input window, operand 2, single buffered']
    #allocation9 [shape = 'u8[8192]{0}', space=vmem, size = 0x2000, scoped, tag = 'output window, operand 0, single buffered']
    %8 = vsyncpa [#allocation4], 0
    %s9 = scalar_lea.sflag [#allocation4], 1
    %10 = vsyncpa %s9, 0
    %11 = vsyncpa [#allocation7], 0
    %s12 = scalar_lea.sflag [#allocation7], 1
    %13 = vsyncpa %s12, 0
    %14 = vsyncpa [#allocation5], 0
    loop: start=0, step=1, limit=6
    $region2: #{base_model_nlp_forward.11} parent=1 // loop_pre_header
      _
    $region3: #{base_model_nlp_forward.11} parent=1 // loop_header
      %s16 = sphi 0, %s20
      %p17 = scmp.ge.s32.totalorder %s16, 6
      %s23 = sphi 0, %s35
      %s24 = sphi 0, %s31
      %s25 = sphi 0, %s23
      %s26 = sphi 0, %s24
      %s27 = sphi 0, %s25
      %s28 = sphi 0, %s26
      %s40 = sphi 0, %s42
      %s43 = sphi 0, %s40
      %s44 = sphi 0, %s43
      %s60 = sphi 0, %s44
      %s66 = sphi 0, %s68
      %s69 = sphi 0, %s66
      %s70 = sphi 0, %s69
      %s86 = sphi 0, %s70
      %s92 = sphi 0, %s94
      %s95 = sphi 0, %s92
      %s96 = sphi 0, %s95
      %s112 = sphi 0, %s96
      %s118 = sphi 0, %s120
      %s121 = sphi 0, %s118
      %s122 = sphi 0, %s121
      %s138 = sphi 0, %s122
    $region4: #{base_model_nlp_forward.11} parent=1 // loop_header_branch
      %19 = sbr.rel (%p17) target = $region8
    $region5: #{base_model_nlp_forward.11} parent=1 // loop_body
      %s21 = ssub.s32 %s16, 1
      %s22 = ssub.s32 %s16, 2
      %s29 = sadd.s32 1, %s24
      %p30 = scmp.ge.s32.totalorder %s29, 4
      %s31 = scalar_select %p30, 0, %s29
      %s32 = sadd.s32 1, %s23
      %s33 = scalar_select %p30, %s32, %s23
      %p34 = scmp.ge.s32.totalorder %s33, 1
      %s35 = scalar_select %p34, 0, %s33
      %s36 = ssub.s32 %s24, %s31
      %s37 = ssub.s32 %s23, %s35
      %s38 = sor.u32 %s36, %s37
      %p39 = scmp.eq.s32.totalorder %s38, 0
      %s41 = sadd.s32 %s40, 1
      %s42 = scalar_select %p39, %s40, %s41
      %p45 = pneg %p39
      %p46 = scmp.eq.s32.totalorder %s16, 3
      %p47 = por %p45, %p46
      %p48 = scmp.ne.s32.totalorder %s40, %s43
      %p49 = scmp.eq.s32.totalorder %s16, 0
      %p50 = por %p48, %p49
      %p51 = scmp.ne.s32.totalorder %s40, %s43
      %p52 = scmp.eq.s32.totalorder %s21, 3
      %p53 = por %p51, %p52
      %p54 = scmp.ne.s32.totalorder %s43, %s44
      %p55 = scmp.eq.s32.totalorder %s21, 0
      %p56 = por %p54, %p55
      %p57 = scmp.ne.s32.totalorder %s43, %s44
      %p58 = scmp.eq.s32.totalorder %s22, 3
      %p59 = por %p57, %p58
      %p61 = scmp.ne.s32.totalorder %s44, %s60
      %p62 = scmp.eq.s32.totalorder %s22, 0
      %p63 = por %p61, %p62
      %s64 = ssub.s32 %s24, %s31
      %p65 = scmp.eq.s32.totalorder %s64, 0
      %s67 = sadd.s32 %s66, 1
      %s68 = scalar_select %p65, %s66, %s67
      %p71 = pneg %p65
      %p72 = scmp.eq.s32.totalorder %s16, 3
      %p73 = por %p71, %p72
      %p74 = scmp.ne.s32.totalorder %s66, %s69
      %p75 = scmp.eq.s32.totalorder %s16, 0
      %p76 = por %p74, %p75
      %p77 = scmp.ne.s32.totalorder %s66, %s69
      %p78 = scmp.eq.s32.totalorder %s21, 3
      %p79 = por %p77, %p78
      %p80 = scmp.ne.s32.totalorder %s69, %s70
      %p81 = scmp.eq.s32.totalorder %s21, 0
      %p82 = por %p80, %p81
      %p83 = scmp.ne.s32.totalorder %s69, %s70
      %p84 = scmp.eq.s32.totalorder %s22, 3
      %p85 = por %p83, %p84
      %p87 = scmp.ne.s32.totalorder %s70, %s86
      %p88 = scmp.eq.s32.totalorder %s22, 0
      %p89 = por %p87, %p88
      %s90 = ssub.s32 %s23, %s35
      %p91 = scmp.eq.s32.totalorder %s90, 0
      %s93 = sadd.s32 %s92, 1
      %s94 = scalar_select %p91, %s92, %s93
      %p97 = pneg %p91
      %p98 = scmp.eq.s32.totalorder %s16, 3
      %p99 = por %p97, %p98
      %p100 = scmp.ne.s32.totalorder %s92, %s95
      %p101 = scmp.eq.s32.totalorder %s16, 0
      %p102 = por %p100, %p101
      %p103 = scmp.ne.s32.totalorder %s92, %s95
      %p104 = scmp.eq.s32.totalorder %s21, 3
      %p105 = por %p103, %p104
      %p106 = scmp.ne.s32.totalorder %s95, %s96
      %p107 = scmp.eq.s32.totalorder %s21, 0
      %p108 = por %p106, %p107
      %p109 = scmp.ne.s32.totalorder %s95, %s96
      %p110 = scmp.eq.s32.totalorder %s22, 3
      %p111 = por %p109, %p110
      %p113 = scmp.ne.s32.totalorder %s96, %s112
      %p114 = scmp.eq.s32.totalorder %s22, 0
      %p115 = por %p113, %p114
      %s116 = ssub.s32 %s23, %s35
      %p117 = scmp.eq.s32.totalorder %s116, 0
      %s119 = sadd.s32 %s118, 1
      %s120 = scalar_select %p117, %s118, %s119
      %p123 = pneg %p117
      %p124 = scmp.eq.s32.totalorder %s16, 3
      %p125 = por %p123, %p124
      %p126 = scmp.ne.s32.totalorder %s118, %s121
      %p127 = scmp.eq.s32.totalorder %s16, 0
      %p128 = por %p126, %p127
      %p129 = scmp.ne.s32.totalorder %s118, %s121
      %p130 = scmp.eq.s32.totalorder %s21, 3
      %p131 = por %p129, %p130
      %p132 = scmp.ne.s32.totalorder %s121, %s122
      %p133 = scmp.eq.s32.totalorder %s21, 0
      %p134 = por %p132, %p133
      %p135 = scmp.ne.s32.totalorder %s121, %s122
      %p136 = scmp.eq.s32.totalorder %s22, 3
      %p137 = por %p135, %p136
      %p139 = scmp.ne.s32.totalorder %s122, %s138
      %p140 = scmp.eq.s32.totalorder %s22, 0
      %p141 = por %p139, %p140
      %p142 = scmp.le.s32.totalorder 1, %s16
      %p143 = scmp.lt.s32.totalorder %s16, 5
      %p144 = pnand %p142, %p143
      %p145 = pneg %p144
      // Predicated region
      $region9: #{base_model_nlp_forward.11} parent=5 // pred_check
        _
      $region10: #{base_model_nlp_forward.11} parent=5 // pred_check_branch
        %147 = sbr.rel (%p144) target = $region12
      $region11: #{base_model_nlp_forward.11} parent=5 // pred_region
        %s148 = ssub.s32 %s16, 1
        // Predicated region
        $region13: #{base_model_nlp_forward.11} parent=11 // pred_check
          %p149 = pneg %p108
        $region14: #{base_model_nlp_forward.11} parent=11 // pred_check_branch
          %151 = sbr.rel (%p149) target = $region16
        $region15: #{base_model_nlp_forward.11} parent=11 // pred_region
          %s152 = smul.u32 2, %s25
          %s154 = ssub.s32 256, 256
          %155 = vsyncadd [#allocation7], %s154
          %s156 = smul.addr %s152, 128
          %s157 = scalar_lea.hbm %s2, %s156
          %s158 = sshll.u32 [#allocation8], 4
          %s159 = int_to_ptr.vmem [resolvable:$true] %s158
          %164 = dma.hbm_to_vmem [thread:$0]  %s157, 256, %s159, [#allocation7], 128, 128, 8
        $region16: #{base_model_nlp_forward.11} parent=11 // pred_fallthru
          _
      $region12: #{base_model_nlp_forward.11} parent=5 // pred_fallthru
        _
      %p165 = scmp.lt.s32.totalorder %s16, 4
      // Predicated region
      $region17: #{base_model_nlp_forward.11} parent=5 // pred_check
        %p166 = pneg %p165
      $region18: #{base_model_nlp_forward.11} parent=5 // pred_check_branch
        %168 = sbr.rel (%p166) target = $region20
      $region19: #{base_model_nlp_forward.11} parent=5 // pred_region
        // Predicated region
        $region21: #{base_model_nlp_forward.11} parent=19 // pred_check
          %p169 = pneg %p50
        $region22: #{base_model_nlp_forward.11} parent=19 // pred_check_branch
          %171 = sbr.rel (%p169) target = $region24
        $region23: #{base_model_nlp_forward.11} parent=19 // pred_region
          %s172 = sand.u32 %s40, 1
          %s173 = scalar_lea.sflag [#allocation4], %s172
          %s174 = sand.u32 %s40, 1
          %s175 = smul.addr %s174, 8
          %s176 = scalar_lea.vmem [#allocation3], %s175
          %s177 = smul.u32 2, %s23
          %s179 = ssub.s32 128, 128
          %180 = vsyncadd %s173, %s179
          %s181 = smul.addr %s24, 2
          %s182 = sadd.s32 %s177, %s181
          %s183 = smul.addr %s182, 64
          %s184 = scalar_lea.hbm %s0, %s183
          %s185 = sshll.u32 %s176, 4
          %s186 = int_to_ptr.vmem [resolvable:$true] %s185
          %191 = dma.hbm_to_vmem [thread:$0]  %s184, 128, %s186, %s173, 64, 64, 4
        $region24: #{base_model_nlp_forward.11} parent=19 // pred_fallthru
          _
        // Predicated region
        $region25: #{base_model_nlp_forward.11} parent=19 // pred_check
          %p192 = pneg %p76
        $region26: #{base_model_nlp_forward.11} parent=19 // pred_check_branch
          %194 = sbr.rel (%p192) target = $region28
        $region27: #{base_model_nlp_forward.11} parent=19 // pred_region
          %s195 = sand.u32 %s16, 1
          %s196 = scalar_lea.sflag [#allocation7], %s195
          %s197 = sand.u32 %s66, 1
          %s198 = smul.addr %s197, 4
          %s199 = scalar_lea.vmem [#allocation6], %s198
          %s201 = ssub.s32 64, 64
          %202 = vsyncadd %s196, %s201
          %s203 = smul.addr %s24, 64
          %s204 = scalar_lea.hbm %s1, %s203
          %s206 = sshll.u32 %s199, 4
          %s207 = int_to_ptr.vmem [resolvable:$true] %s206
          %209 = dma.hbm_to_vmem [thread:$0]  %s204, 64, %s207, %s196
        $region28: #{base_model_nlp_forward.11} parent=19 // pred_fallthru
          _
      $region20: #{base_model_nlp_forward.11} parent=5 // pred_fallthru
        _
      %p210 = scmp.le.s32.totalorder 1, %s16
      %p211 = scmp.lt.s32.totalorder %s16, 5
      %p212 = pnand %p210, %p211
      %p213 = pneg %p212
      // Predicated region
      $region29: #{base_model_nlp_forward.11} parent=5 // pred_check
        _
      $region30: #{base_model_nlp_forward.11} parent=5 // pred_check_branch
        %215 = sbr.rel (%p212) target = $region32
      $region31: #{base_model_nlp_forward.11} parent=5 // pred_region
        %s216 = ssub.s32 %s16, 1
        %s217 = sand.u32 %s43, 1
        %s218 = scalar_lea.sflag [#allocation4], %s217
        %s219 = sand.u32 %s43, 1
        %s220 = smul.addr %s219, 8
        %s221 = scalar_lea.vmem [#allocation3], %s220
        // Predicated region
        $region33: #{base_model_nlp_forward.11} parent=31 // pred_check
          %p222 = pneg %p56
        $region34: #{base_model_nlp_forward.11} parent=31 // pred_check_branch
          %224 = sbr.rel (%p222) target = $region36
        $region35: #{base_model_nlp_forward.11} parent=31 // pred_region
          %225 = dma.done %s218, 128
        $region36: #{base_model_nlp_forward.11} parent=31 // pred_fallthru
          _
        %s226 = sand.u32 %s21, 1
        %s227 = scalar_lea.sflag [#allocation7], %s226
        %s228 = sand.u32 %s69, 1
        %s229 = smul.addr %s228, 4
        %s230 = scalar_lea.vmem [#allocation6], %s229
        // Predicated region
        $region37: #{base_model_nlp_forward.11} parent=31 // pred_check
          %p231 = pneg %p82
        $region38: #{base_model_nlp_forward.11} parent=31 // pred_check_branch
          %233 = sbr.rel (%p231) target = $region40
        $region39: #{base_model_nlp_forward.11} parent=31 // pred_region
          %234 = dma.done %s227, 64
        $region40: #{base_model_nlp_forward.11} parent=31 // pred_fallthru
          _
        // Predicated region
        $region41: #{base_model_nlp_forward.11} parent=31 // pred_check
          %p235 = pneg %p108
        $region42: #{base_model_nlp_forward.11} parent=31 // pred_check_branch
          %237 = sbr.rel (%p235) target = $region44
        $region43: #{base_model_nlp_forward.11} parent=31 // pred_region
          %238 = dma.done [#allocation7], 256
        $region44: #{base_model_nlp_forward.11} parent=31 // pred_fallthru
          _
        %s239 = sand.u32 %s43, 1
        %s240 = scalar_lea.sflag [#allocation4], %s239
        %s241 = sand.u32 %s43, 1
        %s242 = smul.addr %s241, 8
        %s243 = scalar_lea.vmem [#allocation3], %s242
        %p244 = pneg %p56
        %p245 = pneg %p53
        %s246 = sand.u32 %s21, 1
        %s247 = scalar_lea.sflag [#allocation7], %s246
        %s248 = sand.u32 %s69, 1
        %s249 = smul.addr %s248, 4
        %s250 = scalar_lea.vmem [#allocation6], %s249
        %p251 = pneg %p82
        %p252 = pneg %p79
        %p253 = pneg %p108
        %p254 = pneg %p105
        %p255 = pneg %p134
        %p256 = pneg %p131
        %s257 = smul.u32 2, %s25
        %s258 = smul.u32 2, %s25
        %s259 = smul.u32 2, %s25
        %p261 = scmp.eq.s32.totalorder %s26, 0
        // Predicated region
        $region45: #{base_model_nlp_forward.11} parent=31 // pred_check
          %p262 = pneg %p261
        $region46: #{base_model_nlp_forward.11} parent=31 // pred_check_branch
          %264 = sbr.rel (%p262) target = $region48
        $region47: #{base_model_nlp_forward.11} parent=31 // pred_region
          %vm265 = vcmask 261120
          %266 = vst.msk [vmem:[#allocation2] sm:$0xff] %vm265, 0.0
          %267 = vst.msk [vmem:[#allocation2 + $0x8] sm:$0xff] %vm265, 0.0
        $region48: #{base_model_nlp_forward.11} parent=31 // pred_fallthru
          _
        %v268 = vld [vmem:[#allocation2] sm:$0xff]
        %v269 = vld [vmem:[#allocation2 + $0x8] sm:$0xff]
        %v270 = vld [vmem:[%s221] sm:$0xf]
        %v271 = vld [vmem:[%s221 + $0x4] sm:$0xf]
        %v272 = vld [vmem:[%s230] sm:$0xf]
        %v275 = vunpack.c.l.b16 %v270
        %v276 = vunpack.c.l.b16 %v271
        %v277 = vpack.c.b16 %v276, %v275
        %vm278 = vcmask 64512
        %v280 = vsel %vm278, %v277, 0
        %vm282 = vcmask 1043456
        %v284 = vsel %vm282, %v272, 0
        %286 = vmatprep.subr.bf16.mxu0 0
        %287 = vmatpush1.bf16.msra.mxu0 %v284
        %288 = vmatprep.subr.bf16.mxu0 0
        %289 = vmatpush1.bf16.msra.mxu0 0
        %290 = vmatprep.subr.bf16.mxu0 0
        %291 = vmatpush1.bf16.msra.mxu0 0
        %292 = vmatprep.subr.bf16.mxu0 0
        %293 = vmatpush1.bf16.msra.mxu0 0
        %294 = vmatprep.subr.bf16.mxu0 0
        %295 = vmatpush1.bf16.msra.mxu0 0
        %296 = vmatprep.subr.bf16.mxu0 0
        %297 = vmatpush1.bf16.msra.mxu0 0
        %298 = vmatprep.subr.bf16.mxu0 0
        %299 = vmatpush1.bf16.msra.mxu0 0
        %300 = vmatprep.subr.bf16.mxu0 0
        %301 = vmatpush1.bf16.msra.mxu0 0
        %302 = vmatprep.subr.bf16.mxu0 0
        %303 = vmatpush1.bf16.msra.mxu0 0
        %304 = vmatprep.subr.bf16.mxu0 0
        %305 = vmatpush1.bf16.msra.mxu0 0
        %306 = vmatprep.subr.bf16.mxu0 0
        %307 = vmatpush1.bf16.msra.mxu0 0
        %308 = vmatprep.subr.bf16.mxu0 0
        %309 = vmatpush1.bf16.msra.mxu0 0
        %310 = vmatprep.subr.bf16.mxu0 0
        %311 = vmatpush1.bf16.msra.mxu0 0
        %312 = vmatprep.subr.bf16.mxu0 0
        %313 = vmatpush1.bf16.msra.mxu0 0
        %314 = vmatprep.subr.bf16.mxu0 0
        %315 = vmatpush1.bf16.msra.mxu0 0
        %316 = vmatprep.subr.bf16.mxu0 0
        %317 = vmatpush1.bf16.msra.mxu0 0
        %318 = vmatprep.mubr.bf16.mxu0 0
        %319 = vmatmul.mubr.bf16.gmra.mrb[0].mxu0 %v280
        %v320 = vpop.f32.mrb[0].mxu0
        %v321 = vadd.f32 0.0, %v320
        %v322 = vpop.f32.mrb[0].mxu0
        %v323 = vpop.f32.mrb[0].mxu0
        %v324 = vadd.f32 0.0, %v323
        %v325 = vpop.f32.mrb[0].mxu0
        %326 = vdwg.mxu0
        %v327 = vadd.f32 %v268, %v321
        %v328 = vadd.f32 %v269, %v324
        %vm329 = vcmask 261120
        %330 = vst.msk [vmem:[#allocation2] sm:$0xff] %vm329, %v327
        %331 = vst.msk [vmem:[#allocation2 + $0x8] sm:$0xff] %vm329, %v328
        %p332 = scmp.eq.s32.totalorder %s26, 3
        // Predicated region
        $region49: #{base_model_nlp_forward.11} parent=31 // pred_check
          %p333 = pneg %p332
        $region50: #{base_model_nlp_forward.11} parent=31 // pred_check_branch
          %335 = sbr.rel (%p333) target = $region52
        $region51: #{base_model_nlp_forward.11} parent=31 // pred_region
          %v336 = vld [vmem:[#allocation2] sm:$0xff]
          %v337 = vld [vmem:[#allocation2 + $0x8] sm:$0xff]
          %v338 = vld [vmem:[#allocation8] sm:$0xff]
          %v339 = vld [vmem:[#allocation8 + $0x8] sm:$0xff]
          %v340 = vadd.f32 %v336, %v338
          %v341 = vadd.f32 %v337, %v339
          %342 = vst.msk [vmem:[#allocation9] sm:$0xff] %vm329, %v340
          %343 = vst.msk [vmem:[#allocation9 + $0x8] sm:$0xff] %vm329, %v341
        $region52: #{base_model_nlp_forward.11} parent=31 // pred_fallthru
          _
        // Predicated region
        $region53: #{base_model_nlp_forward.11} parent=31 // pred_check
          %p344 = pneg %p131
        $region54: #{base_model_nlp_forward.11} parent=31 // pred_check_branch
          %346 = sbr.rel (%p344) target = $region56
        $region55: #{base_model_nlp_forward.11} parent=31 // pred_region
          %s347 = smul.u32 2, %s25
          %s349 = ssub.s32 256, 256
          %350 = vsyncadd [#allocation5], %s349
          %s351 = smul.addr %s347, 128
          %s352 = scalar_lea.hbm %s3, %s351
          %s353 = sshll.u32 [#allocation9], 4
          %s354 = int_to_ptr.vmem [resolvable:$true] %s353
          %359 = dma.vmem_to_hbm [thread:$0]  %s354, 256, %s352, [#allocation5], 128, 128, 8
        $region56: #{base_model_nlp_forward.11} parent=31 // pred_fallthru
          _
        // Predicated region
        $region57: #{base_model_nlp_forward.11} parent=31 // pred_check
          %p360 = pneg %p131
        $region58: #{base_model_nlp_forward.11} parent=31 // pred_check_branch
          %362 = sbr.rel (%p360) target = $region60
        $region59: #{base_model_nlp_forward.11} parent=31 // pred_region
          %363 = dma.done [#allocation5], 256
        $region60: #{base_model_nlp_forward.11} parent=31 // pred_fallthru
          _
      $region32: #{base_model_nlp_forward.11} parent=5 // pred_fallthru
        _
      %p364 = scmp.le.s32.totalorder 2, %s16
      // Predicated region
      $region61: #{base_model_nlp_forward.11} parent=5 // pred_check
        %p365 = pneg %p364
      $region62: #{base_model_nlp_forward.11} parent=5 // pred_check_branch
        %367 = sbr.rel (%p365) target = $region64
      $region63: #{base_model_nlp_forward.11} parent=5 // pred_region
        %s368 = ssub.s32 %s16, 2
      $region64: #{base_model_nlp_forward.11} parent=5 // pred_fallthru
        _
    $region6: #{base_model_nlp_forward.11} parent=1 // loop_footer
      %s20 = sadd.s32 1, %s16
    $region7: #{base_model_nlp_forward.11} parent=1 // loop_footer_branch
      %15 = sbr.rel target = $region3
    $region8: #{base_model_nlp_forward.11} parent=1 // loop_exit
      _
    %369 = vsyncpa [#allocation4], 1
    %s370 = scalar_lea.sflag [#allocation4], 1
    %371 = vsyncpa %s370, 1
    %372 = vsyncpa [#allocation7], 1
    %s373 = scalar_lea.sflag [#allocation7], 1
    %374 = vsyncpa %s373, 1
    %375 = vsyncpa [#allocation5], 1
    %s376 = scalar_lea.sflag [#allocation5], 1
    %377 = vsyncpa %s376, 1

// kernel: base_model_nlp_forward.9
$region0: #{base_model_nlp_forward.9}
  #allocation0 [shape = 'u32[]', space=smem, size = 0x4, offset = 0x4, fixed_abs, tag = 'smem constant byte address 0x4 - core index']
  #allocation1 [shape = 'u32[144,128]{1,0:T(1,128)}', space=vmem, size = 0x12000, scoped, tag = 'internal scratch']
  #allocation2 [shape = 'bf16[16,32]{1,0:T(16,128)(2,1)}', space=vmem, size = 0x1000, scoped, tag = 'scratch operand']
  %s0 = inlined_call_operand.hbm [shape: f32[16,32], index: 0, kind: input, shape index: {}]
  %s1 = inlined_call_operand.hbm [shape: f32[1,32], index: 1, kind: input, shape index: {}]
  %s2 = inlined_call_operand.hbm [shape: bf16[12,32,8], index: 2, kind: input, shape index: {}]
  %s3 = inlined_call_operand.hbm [shape: bf16[12,16,8], index: 3, kind: output, shape index: {}]
  %s4 = sld [smem:[#allocation0]]
  $region61: #{base_model_nlp_forward.9} parent=0
    _
  %s6 = ssub.s32 1, %s4
  %s7 = scalar_select 0, %s6, %s4
  $region1: #{base_model_nlp_forward.9} parent=0
    #allocation3 [shape = 'u8[8192]{0}', space=vmem, size = 0x2000, scoped, tag = 'input window, operand 0, single buffered']
    #allocation4 [shape = 's32[2]{0}', space=sflag, size = 0x8, scoped, tag = 'scoped memory for base_model_nlp_forward.9']
    #allocation5 [shape = 's32[2]{0}', space=sflag, size = 0x8, scoped, tag = 'scoped memory for base_model_nlp_forward.9']
    #allocation6 [shape = 'u8[512]{0}', space=vmem, size = 0x400, scoped, tag = 'input window, operand 1, single buffered']
    #allocation7 [shape = 's32[1]{0}', space=sflag, size = 0x4, scoped, tag = 'scoped memory for base_model_nlp_forward.9']
    #allocation8 [shape = 'u8[16384]{0}', space=vmem, size = 0x4000, scoped, tag = 'input window, operand 2']
    #allocation9 [shape = 'u8[8192]{0}', space=vmem, size = 0x2000, scoped, tag = 'output window, operand 0']
    %8 = vsyncpa [#allocation4], 0
    %9 = vsyncpa [#allocation7], 0
    %10 = vsyncpa [#allocation5], 0
    %s11 = scalar_lea.sflag [#allocation5], 1
    %12 = vsyncpa %s11, 0
    loop: start=0, step=1, limit=14
    $region2: #{base_model_nlp_forward.9} parent=1 // loop_pre_header
      _
    $region3: #{base_model_nlp_forward.9} parent=1 // loop_header
      %s14 = sphi 0, %s18
      %p15 = scmp.ge.s32.totalorder %s14, 14
      %s21 = sphi 0, %s33
      %s22 = sphi 0, %s29
      %s23 = sphi 0, %s21
      %s24 = sphi 0, %s22
      %s25 = sphi 0, %s23
      %s26 = sphi 0, %s24
      %s36 = sphi 0, %s38
      %s39 = sphi 0, %s36
      %s40 = sphi 0, %s39
      %s56 = sphi 0, %s40
      %s60 = sphi 0, %s60
      %s62 = sphi 0, %s60
      %s63 = sphi 0, %s62
      %s77 = sphi 0, %s63
      %s83 = sphi 0, %s85
      %s86 = sphi 0, %s83
      %s87 = sphi 0, %s86
      %s103 = sphi 0, %s87
      %s111 = sphi 0, %s113
      %s114 = sphi 0, %s111
      %s115 = sphi 0, %s114
      %s131 = sphi 0, %s115
    $region4: #{base_model_nlp_forward.9} parent=1 // loop_header_branch
      %17 = sbr.rel (%p15) target = $region8
    $region5: #{base_model_nlp_forward.9} parent=1 // loop_body
      %s19 = ssub.s32 %s14, 1
      %s20 = ssub.s32 %s14, 2
      %s27 = sadd.s32 1, %s22
      %p28 = scmp.ge.s32.totalorder %s27, 12
      %s29 = scalar_select %p28, 0, %s27
      %s30 = sadd.s32 1, %s21
      %s31 = scalar_select %p28, %s30, %s21
      %p32 = scmp.ge.s32.totalorder %s31, 1
      %s33 = scalar_select %p32, 0, %s31
      %s34 = ssub.s32 %s21, %s33
      %p35 = scmp.eq.s32.totalorder %s34, 0
      %s37 = sadd.s32 %s36, 1
      %s38 = scalar_select %p35, %s36, %s37
      %p41 = pneg %p35
      %p42 = scmp.eq.s32.totalorder %s14, 11
      %p43 = por %p41, %p42
      %p44 = scmp.ne.s32.totalorder %s36, %s39
      %p45 = scmp.eq.s32.totalorder %s14, 0
      %p46 = por %p44, %p45
      %p47 = scmp.ne.s32.totalorder %s36, %s39
      %p48 = scmp.eq.s32.totalorder %s19, 11
      %p49 = por %p47, %p48
      %p50 = scmp.ne.s32.totalorder %s39, %s40
      %p51 = scmp.eq.s32.totalorder %s19, 0
      %p52 = por %p50, %p51
      %p53 = scmp.ne.s32.totalorder %s39, %s40
      %p54 = scmp.eq.s32.totalorder %s20, 11
      %p55 = por %p53, %p54
      %p57 = scmp.ne.s32.totalorder %s40, %s56
      %p58 = scmp.eq.s32.totalorder %s20, 0
      %p59 = por %p57, %p58
      %s61 = sadd.s32 %s60, 1
      %p64 = scmp.eq.s32.totalorder %s14, 11
      %p65 = scmp.ne.s32.totalorder %s60, %s62
      %p66 = scmp.eq.s32.totalorder %s14, 0
      %p67 = por %p65, %p66
      %p68 = scmp.ne.s32.totalorder %s60, %s62
      %p69 = scmp.eq.s32.totalorder %s19, 11
      %p70 = por %p68, %p69
      %p71 = scmp.ne.s32.totalorder %s62, %s63
      %p72 = scmp.eq.s32.totalorder %s19, 0
      %p73 = por %p71, %p72
      %p74 = scmp.ne.s32.totalorder %s62, %s63
      %p75 = scmp.eq.s32.totalorder %s20, 11
      %p76 = por %p74, %p75
      %p78 = scmp.ne.s32.totalorder %s63, %s77
      %p79 = scmp.eq.s32.totalorder %s20, 0
      %p80 = por %p78, %p79
      %s81 = ssub.s32 %s22, %s29
      %p82 = scmp.eq.s32.totalorder %s81, 0
      %s84 = sadd.s32 %s83, 1
      %s85 = scalar_select %p82, %s83, %s84
      %p88 = pneg %p82
      %p89 = scmp.eq.s32.totalorder %s14, 11
      %p90 = por %p88, %p89
      %p91 = scmp.ne.s32.totalorder %s83, %s86
      %p92 = scmp.eq.s32.totalorder %s14, 0
      %p93 = por %p91, %p92
      %p94 = scmp.ne.s32.totalorder %s83, %s86
      %p95 = scmp.eq.s32.totalorder %s19, 11
      %p96 = por %p94, %p95
      %p97 = scmp.ne.s32.totalorder %s86, %s87
      %p98 = scmp.eq.s32.totalorder %s19, 0
      %p99 = por %p97, %p98
      %p100 = scmp.ne.s32.totalorder %s86, %s87
      %p101 = scmp.eq.s32.totalorder %s20, 11
      %p102 = por %p100, %p101
      %p104 = scmp.ne.s32.totalorder %s87, %s103
      %p105 = scmp.eq.s32.totalorder %s20, 0
      %p106 = por %p104, %p105
      %s107 = ssub.s32 %s22, %s29
      %s108 = ssub.s32 %s21, %s33
      %s109 = sor.u32 %s107, %s108
      %p110 = scmp.eq.s32.totalorder %s109, 0
      %s112 = sadd.s32 %s111, 1
      %s113 = scalar_select %p110, %s111, %s112
      %p116 = pneg %p110
      %p117 = scmp.eq.s32.totalorder %s14, 11
      %p118 = por %p116, %p117
      %p119 = scmp.ne.s32.totalorder %s111, %s114
      %p120 = scmp.eq.s32.totalorder %s14, 0
      %p121 = por %p119, %p120
      %p122 = scmp.ne.s32.totalorder %s111, %s114
      %p123 = scmp.eq.s32.totalorder %s19, 11
      %p124 = por %p122, %p123
      %p125 = scmp.ne.s32.totalorder %s114, %s115
      %p126 = scmp.eq.s32.totalorder %s19, 0
      %p127 = por %p125, %p126
      %p128 = scmp.ne.s32.totalorder %s114, %s115
      %p129 = scmp.eq.s32.totalorder %s20, 11
      %p130 = por %p128, %p129
      %p132 = scmp.ne.s32.totalorder %s115, %s131
      %p133 = scmp.eq.s32.totalorder %s20, 0
      %p134 = por %p132, %p133
      %p135 = scmp.le.s32.totalorder 1, %s14
      %p136 = scmp.lt.s32.totalorder %s14, 13
      %p137 = pnand %p135, %p136
      %p138 = pneg %p137
      // Predicated region
      $region9: #{base_model_nlp_forward.9} parent=5 // pred_check
        _
      $region10: #{base_model_nlp_forward.9} parent=5 // pred_check_branch
        %140 = sbr.rel (%p137) target = $region12
      $region11: #{base_model_nlp_forward.9} parent=5 // pred_region
        %s141 = ssub.s32 %s14, 1
        // Predicated region
        $region13: #{base_model_nlp_forward.9} parent=11 // pred_check
          %p142 = pneg %p52
        $region14: #{base_model_nlp_forward.9} parent=11 // pred_check_branch
          %144 = sbr.rel (%p142) target = $region16
        $region15: #{base_model_nlp_forward.9} parent=11 // pred_region
          %s145 = smul.u32 2, %s23
          %s147 = ssub.s32 256, 256
          %148 = vsyncadd [#allocation4], %s147
          %s149 = smul.addr %s145, 128
          %s150 = scalar_lea.hbm %s0, %s149
          %s151 = sshll.u32 [#allocation3], 4
          %s152 = int_to_ptr.vmem [resolvable:$true] %s151
          %157 = dma.hbm_to_vmem [thread:$0]  %s150, 256, %s152, [#allocation4], 128, 128, 8
        $region16: #{base_model_nlp_forward.9} parent=11 // pred_fallthru
          _
        // Predicated region
        $region17: #{base_model_nlp_forward.9} parent=11 // pred_check
          %p158 = pneg %p73
        $region18: #{base_model_nlp_forward.9} parent=11 // pred_check_branch
          %160 = sbr.rel (%p158) target = $region20
        $region19: #{base_model_nlp_forward.9} parent=11 // pred_region
          %s162 = ssub.s32 16, 16
          %163 = vsyncadd [#allocation7], %s162
          %s165 = sshll.u32 [#allocation6], 4
          %s166 = int_to_ptr.vmem [resolvable:$true] %s165
          %168 = dma.hbm_to_vmem [thread:$0]  %s1, 16, %s166, [#allocation7]
        $region20: #{base_model_nlp_forward.9} parent=11 // pred_fallthru
          _
      $region12: #{base_model_nlp_forward.9} parent=5 // pred_fallthru
        _
      %p169 = scmp.lt.s32.totalorder %s14, 12
      // Predicated region
      $region21: #{base_model_nlp_forward.9} parent=5 // pred_check
        %p170 = pneg %p169
      $region22: #{base_model_nlp_forward.9} parent=5 // pred_check_branch
        %172 = sbr.rel (%p170) target = $region24
      $region23: #{base_model_nlp_forward.9} parent=5 // pred_region
        // Predicated region
        $region25: #{base_model_nlp_forward.9} parent=23 // pred_check
          %p173 = pneg %p93
        $region26: #{base_model_nlp_forward.9} parent=23 // pred_check_branch
          %175 = sbr.rel (%p173) target = $region28
        $region27: #{base_model_nlp_forward.9} parent=23 // pred_region
          %s176 = sand.u32 %s14, 1
          %s177 = scalar_lea.sflag [#allocation4], %s176
          %s178 = sand.u32 %s83, 1
          %s179 = smul.addr %s178, 16
          %s180 = scalar_lea.vmem [#allocation8], %s179
          %s182 = ssub.s32 256, 256
          %183 = vsyncadd %s177, %s182
          %s184 = smul.addr %s22, 4
          %s185 = smul.addr %s184, 64
          %s186 = scalar_lea.hbm %s2, %s185
          %s187 = sshll.u32 %s180, 4
          %s188 = int_to_ptr.vmem [resolvable:$true] %s187
          %193 = dma.hbm_to_vmem [thread:$0]  %s186, 256, %s188, %s177, 64, 64, 4
        $region28: #{base_model_nlp_forward.9} parent=23 // pred_fallthru
          _
      $region24: #{base_model_nlp_forward.9} parent=5 // pred_fallthru
        _
      %p194 = scmp.le.s32.totalorder 1, %s14
      %p195 = scmp.lt.s32.totalorder %s14, 13
      %p196 = pnand %p194, %p195
      %p197 = pneg %p196
      // Predicated region
      $region29: #{base_model_nlp_forward.9} parent=5 // pred_check
        _
      $region30: #{base_model_nlp_forward.9} parent=5 // pred_check_branch
        %199 = sbr.rel (%p196) target = $region32
      $region31: #{base_model_nlp_forward.9} parent=5 // pred_region
        %s200 = ssub.s32 %s14, 1
        // Predicated region
        $region33: #{base_model_nlp_forward.9} parent=31 // pred_check
          %p201 = pneg %p52
        $region34: #{base_model_nlp_forward.9} parent=31 // pred_check_branch
          %203 = sbr.rel (%p201) target = $region36
        $region35: #{base_model_nlp_forward.9} parent=31 // pred_region
          %204 = dma.done [#allocation4], 256
        $region36: #{base_model_nlp_forward.9} parent=31 // pred_fallthru
          _
        // Predicated region
        $region37: #{base_model_nlp_forward.9} parent=31 // pred_check
          %p205 = pneg %p73
        $region38: #{base_model_nlp_forward.9} parent=31 // pred_check_branch
          %207 = sbr.rel (%p205) target = $region40
        $region39: #{base_model_nlp_forward.9} parent=31 // pred_region
          %208 = dma.done [#allocation7], 16
        $region40: #{base_model_nlp_forward.9} parent=31 // pred_fallthru
          _
        %s209 = sand.u32 %s19, 1
        %s210 = scalar_lea.sflag [#allocation4], %s209
        %s211 = sand.u32 %s86, 1
        %s212 = smul.addr %s211, 16
        %s213 = scalar_lea.vmem [#allocation8], %s212
        // Predicated region
        $region41: #{base_model_nlp_forward.9} parent=31 // pred_check
          %p214 = pneg %p99
        $region42: #{base_model_nlp_forward.9} parent=31 // pred_check_branch
          %216 = sbr.rel (%p214) target = $region44
        $region43: #{base_model_nlp_forward.9} parent=31 // pred_region
          %217 = dma.done %s210, 256
        $region44: #{base_model_nlp_forward.9} parent=31 // pred_fallthru
          _
        %p218 = pneg %p52
        %p219 = pneg %p49
        %p220 = pneg %p73
        %p221 = pneg %p70
        %s222 = sand.u32 %s19, 1
        %s223 = scalar_lea.sflag [#allocation4], %s222
        %s224 = sand.u32 %s86, 1
        %s225 = smul.addr %s224, 16
        %s226 = scalar_lea.vmem [#allocation8], %s225
        %p227 = pneg %p99
        %p228 = pneg %p96
        %p229 = pneg %p127
        %p230 = pneg %p124
        %s231 = sand.u32 %s114, 1
        %s232 = scalar_lea.sflag [#allocation5], %s231
        %s233 = sand.u32 %s114, 1
        %s234 = smul.addr %s233, 8
        %s235 = scalar_lea.vmem [#allocation9], %s234
        %s236 = smul.u32 2, %s23
        %s237 = smul.u32 2, %s23
        %p239 = scmp.eq.s32.totalorder %s24, 0
        // Predicated region
        $region45: #{base_model_nlp_forward.9} parent=31 // pred_check
          %p240 = pneg %p239
        $region46: #{base_model_nlp_forward.9} parent=31 // pred_check_branch
          %242 = sbr.rel (%p240) target = $region48
        $region47: #{base_model_nlp_forward.9} parent=31 // pred_region
          %v243 = vld [vmem:[#allocation3] sm:$0xff]
          %v244 = vld [vmem:[#allocation3 + $0x8] sm:$0xff]
          %v245 = vmul.f32 %v243, %v243
          %v246 = vmul.f32 %v244, %v244
          %vm247 = vcmask 261120
          %v248 = vsel %vm247, %v245, 0.0
          %249 = vadd.xlane.f32.xlu0 %v248
          %v250 = vpop.xlane.xlu0 %249
          %v251 = vsel %vm247, %v246, 0.0
          %252 = vadd.xlane.f32.xlu0 %v251
          %v253 = vpop.xlane.xlu0 %252
          %v254 = vrcp.pop 32.0
          %v255 = vmul.f32 %v250, %v254
          %v256 = vmul.f32 %v253, %v254
          %v257 = vadd.f32 %v255, 1e-06
          %v258 = vadd.f32 %v256, 1e-06
          %v259 = vrsqrt.pop %v257
          %v260 = vrsqrt.pop %v258
          %v261 = vmul.f32 %v243, %v259
          %v262 = vmul.f32 %v244, %v260
          %v263 = vld [vmem:[#allocation6] sm:$0x1]
          %v265 = vlaneseq
          %v266 = vshrl.u32 %v265, 7
          %v267 = vsub.s32 0, %v266
          %v268 = vrot.slane %v263, %v267
          %v270 = vmul.f32 %v261, %v268
          %v271 = vmul.f32 %v262, %v268
          %v272 = vpack.c.bf16 %v271, %v270
          %273 = vst.msk [vmem:[#allocation2] sm:$0xff] %vm247, %v272
        $region48: #{base_model_nlp_forward.9} parent=31 // pred_fallthru
          _
        %v274 = vld [vmem:[#allocation2] sm:$0xff]
        %v275 = vld [vmem:[%s213] sm:$0xf]
        %v276 = vld [vmem:[%s213 + $0x4] sm:$0xf]
        %v277 = vld [vmem:[%s213 + $0x8] sm:$0xf]
        %v278 = vld [vmem:[%s213 + $0xc] sm:$0xf]
        %v283 = vunpack.c.l.b16 %v275
        %v284 = vunpack.c.l.b16 %v276
        %v285 = vunpack.c.l.b16 %v277
        %v286 = vunpack.c.l.b16 %v278
        %v287 = vpack.c.b16 %v284, %v283
        %v288 = vpack.c.b16 %v286, %v285
        %vm291 = vcmask 261120
        %v293 = vsel %vm291, %v274, 0
        %295 = vmatprep.subr.bf16.mxu0 0
        %296 = vmatpush1.bf16.msra.mxu0 %v287
        %297 = vmatprep.subr.bf16.mxu0 0
        %298 = vmatpush1.bf16.msra.mxu0 %v288
        %299 = vmatprep.subr.bf16.mxu0 0
        %300 = vmatpush1.bf16.msra.mxu0 0
        %301 = vmatprep.subr.bf16.mxu0 0
        %302 = vmatpush1.bf16.msra.mxu0 0
        %303 = vmatprep.subr.bf16.mxu0 0
        %304 = vmatpush1.bf16.msra.mxu0 0
        %305 = vmatprep.subr.bf16.mxu0 0
        %306 = vmatpush1.bf16.msra.mxu0 0
        %307 = vmatprep.subr.bf16.mxu0 0
        %308 = vmatpush1.bf16.msra.mxu0 0
        %309 = vmatprep.subr.bf16.mxu0 0
        %310 = vmatpush1.bf16.msra.mxu0 0
        %311 = vmatprep.subr.bf16.mxu0 0
        %312 = vmatpush1.bf16.msra.mxu0 0
        %313 = vmatprep.subr.bf16.mxu0 0
        %314 = vmatpush1.bf16.msra.mxu0 0
        %315 = vmatprep.subr.bf16.mxu0 0
        %316 = vmatpush1.bf16.msra.mxu0 0
        %317 = vmatprep.subr.bf16.mxu0 0
        %318 = vmatpush1.bf16.msra.mxu0 0
        %319 = vmatprep.subr.bf16.mxu0 0
        %320 = vmatpush1.bf16.msra.mxu0 0
        %321 = vmatprep.subr.bf16.mxu0 0
        %322 = vmatpush1.bf16.msra.mxu0 0
        %323 = vmatprep.subr.bf16.mxu0 0
        %324 = vmatpush1.bf16.msra.mxu0 0
        %325 = vmatprep.subr.bf16.mxu0 0
        %326 = vmatpush1.bf16.msra.mxu0 0
        %327 = vmatprep.mubr.bf16.mxu0 0
        %328 = vmatmul.mubr.bf16.gmra.mrb[0].mxu0 %v293
        %v329 = vpop.f32.mrb[0].mxu0
        %v330 = vadd.f32 0.0, %v329
        %v331 = vpop.f32.mrb[0].mxu0
        %v332 = vpop.f32.mrb[0].mxu0
        %v333 = vadd.f32 0.0, %v332
        %v334 = vpop.f32.mrb[0].mxu0
        %335 = vdwg.mxu0
        %v336 = vpack.c.bf16 %v333, %v330
        %v338 = vunpack.c.l.b16 %v336
        %v339 = vunpack.c.h.b16 %v336
        %v340 = vpack.c.b16 %v338, %v338
        %v341 = vpack.c.b16 %v339, %v339
        %vm344 = vcmask 60416
        %345 = vst.msk [vmem:[%s235] sm:$0xf] %vm344, %v340
        %346 = vst.msk [vmem:[%s235 + $0x4] sm:$0xf] %vm344, %v341
        %s347 = sand.u32 %s114, 1
        %s348 = scalar_lea.sflag [#allocation5], %s347
        %s349 = sand.u32 %s114, 1
        %s350 = smul.addr %s349, 8
        %s351 = scalar_lea.vmem [#allocation9], %s350
        // Predicated region
        $region49: #{base_model_nlp_forward.9} parent=31 // pred_check
          %p352 = pneg %p124
        $region50: #{base_model_nlp_forward.9} parent=31 // pred_check_branch
          %354 = sbr.rel (%p352) target = $region52
        $region51: #{base_model_nlp_forward.9} parent=31 // pred_region
          %s355 = smul.u32 2, %s23
          %s357 = ssub.s32 128, 128
          %358 = vsyncadd %s348, %s357
          %s359 = smul.addr %s24, 2
          %s360 = sadd.s32 %s355, %s359
          %s361 = smul.addr %s360, 64
          %s362 = scalar_lea.hbm %s3, %s361
          %s363 = sshll.u32 %s351, 4
          %s364 = int_to_ptr.vmem [resolvable:$true] %s363
          %369 = dma.vmem_to_hbm [thread:$0]  %s364, 128, %s362, %s348, 64, 64, 4
        $region52: #{base_model_nlp_forward.9} parent=31 // pred_fallthru
          _
      $region32: #{base_model_nlp_forward.9} parent=5 // pred_fallthru
        _
      %p370 = scmp.le.s32.totalorder 2, %s14
      // Predicated region
      $region53: #{base_model_nlp_forward.9} parent=5 // pred_check
        %p371 = pneg %p370
      $region54: #{base_model_nlp_forward.9} parent=5 // pred_check_branch
        %373 = sbr.rel (%p371) target = $region56
      $region55: #{base_model_nlp_forward.9} parent=5 // pred_region
        %s374 = ssub.s32 %s14, 2
        // Predicated region
        $region57: #{base_model_nlp_forward.9} parent=55 // pred_check
          %p375 = pneg %p130
        $region58: #{base_model_nlp_forward.9} parent=55 // pred_check_branch
          %377 = sbr.rel (%p375) target = $region60
        $region59: #{base_model_nlp_forward.9} parent=55 // pred_region
          %s378 = sand.u32 %s115, 1
          %s379 = scalar_lea.sflag [#allocation5], %s378
          %s380 = sand.u32 %s115, 1
          %s381 = smul.addr %s380, 8
          %s382 = scalar_lea.vmem [#allocation9], %s381
          %383 = dma.done %s379, 128
        $region60: #{base_model_nlp_forward.9} parent=55 // pred_fallthru
          _
      $region56: #{base_model_nlp_forward.9} parent=5 // pred_fallthru
        _
    $region6: #{base_model_nlp_forward.9} parent=1 // loop_footer
      %s18 = sadd.s32 1, %s14
    $region7: #{base_model_nlp_forward.9} parent=1 // loop_footer_branch
      %13 = sbr.rel target = $region3
    $region8: #{base_model_nlp_forward.9} parent=1 // loop_exit
      _
    %384 = vsyncpa [#allocation4], 1
    %s385 = scalar_lea.sflag [#allocation4], 1
    %386 = vsyncpa %s385, 1
    %387 = vsyncpa [#allocation7], 1
    %388 = vsyncpa [#allocation5], 1
    %s389 = scalar_lea.sflag [#allocation5], 1
    %390 = vsyncpa %s389, 1

// kernel: base_model_nlp_forward.10
$region0: #{base_model_nlp_forward.10}
  #allocation0 [shape = 'u32[]', space=smem, size = 0x4, offset = 0x4, fixed_abs, tag = 'smem constant byte address 0x4 - core index']
  #allocation1 [shape = 'u32[144,128]{1,0:T(1,128)}', space=vmem, size = 0x12000, scoped, tag = 'internal scratch']
  #allocation2 [shape = 'f32[8,1]{1,0:T(8,128)}', space=vmem, size = 0x1000, scoped, tag = 'scratch operand']
  #allocation3 [shape = 'f32[8,1]{1,0:T(8,128)}', space=vmem, size = 0x1000, scoped, tag = 'scratch operand']
  #allocation4 [shape = 'f32[8,8]{1,0:T(8,128)}', space=vmem, size = 0x1000, scoped, tag = 'scratch operand']
  %s0 = inlined_call_operand.hbm [shape: bf16[3,4,2,8,8], index: 0, kind: input, shape index: {}, may-alias: {0,1,2}]
  %s1 = inlined_call_operand.hbm [shape: bf16[3,4,2,8,8], index: 1, kind: input, shape index: {}, may-alias: {0,1,2}]
  %s2 = inlined_call_operand.hbm [shape: bf16[3,4,2,8,8], index: 2, kind: input, shape index: {}, may-alias: {0,1,2}]
  %s3 = inlined_call_operand.hbm [shape: f32[4,8,8], index: 3, kind: input, shape index: {}]
  %s4 = inlined_call_operand.hbm [shape: f32[2,1,8], index: 4, kind: input, shape index: {}]
  %s5 = inlined_call_operand.hbm [shape: bf16[4,2,8,8], index: 5, kind: output, shape index: {}]
  %s6 = sld [smem:[#allocation0]]
  $region81: #{base_model_nlp_forward.10} parent=0
    _
  %s8 = ssub.s32 1, %s6
  %s9 = scalar_select 0, %s8, %s6
  $region1: #{base_model_nlp_forward.10} parent=0
    #allocation5 [shape = 'u8[4096]{0}', space=vmem, size = 0x1000, scoped, tag = 'input window, operand 0']
    #allocation6 [shape = 's32[2]{0}', space=sflag, size = 0x8, scoped, tag = 'scoped memory for base_model_nlp_forward.10']
    #allocation7 [shape = 's32[2]{0}', space=sflag, size = 0x8, scoped, tag = 'scoped memory for base_model_nlp_forward.10']
    #allocation8 [shape = 'u8[4096]{0}', space=vmem, size = 0x1000, scoped, tag = 'input window, operand 1']
    #allocation9 [shape = 's32[2]{0}', space=sflag, size = 0x8, scoped, tag = 'scoped memory for base_model_nlp_forward.10']
    #allocation10 [shape = 'u8[4096]{0}', space=vmem, size = 0x1000, scoped, tag = 'input window, operand 2']
    #allocation11 [shape = 'u8[8192]{0}', space=vmem, size = 0x2000, scoped, tag = 'input window, operand 3']
    #allocation12 [shape = 's32[2]{0}', space=sflag, size = 0x8, scoped, tag = 'scoped memory for base_model_nlp_forward.10']
    #allocation13 [shape = 'u8[1024]{0}', space=vmem, size = 0x400, scoped, tag = 'input window, operand 4']
    #allocation14 [shape = 'u8[4096]{0}', space=vmem, size = 0x1000, scoped, tag = 'output window, operand 0']
    %10 = vsyncpa [#allocation6], 0
    %s11 = scalar_lea.sflag [#allocation6], 1
    %12 = vsyncpa %s11, 0
    %13 = vsyncpa [#allocation9], 0
    %s14 = scalar_lea.sflag [#allocation9], 1
    %15 = vsyncpa %s14, 0
    %16 = vsyncpa [#allocation12], 0
    %s17 = scalar_lea.sflag [#allocation12], 1
    %18 = vsyncpa %s17, 0
    %19 = vsyncpa [#allocation7], 0
    %s20 = scalar_lea.sflag [#allocation7], 1
    %21 = vsyncpa %s20, 0
    loop: start=0, step=1, limit=10
    $region2: #{base_model_nlp_forward.10} parent=1 // loop_pre_header
      _
    $region3: #{base_model_nlp_forward.10} parent=1 // loop_header
      %s23 = sphi 0, %s27
      %p24 = scmp.ge.s32.totalorder %s23, 10
      %s30 = sphi 0, %s56
      %s31 = sphi 0, %s52
      %s32 = sphi 0, %s48
      %s33 = sphi 0, %s44
      %s34 = sphi 0, %s30
      %s35 = sphi 0, %s31
      %s36 = sphi 0, %s32
      %s37 = sphi 0, %s33
      %s38 = sphi 0, %s34
      %s39 = sphi 0, %s35
      %s40 = sphi 0, %s36
      %s41 = sphi 0, %s37
      %s63 = sphi 0, %s65
      %s66 = sphi 0, %s63
      %s67 = sphi 0, %s66
      %s83 = sphi 0, %s67
      %s93 = sphi 0, %s95
      %s96 = sphi 0, %s93
      %s97 = sphi 0, %s96
      %s113 = sphi 0, %s97
      %s123 = sphi 0, %s125
      %s126 = sphi 0, %s123
      %s127 = sphi 0, %s126
      %s143 = sphi 0, %s127
      %s153 = sphi 0, %s155
      %s156 = sphi 0, %s153
      %s157 = sphi 0, %s156
      %s173 = sphi 0, %s157
      %s181 = sphi 0, %s183
      %s184 = sphi 0, %s181
      %s185 = sphi 0, %s184
      %s201 = sphi 0, %s185
      %s211 = sphi 0, %s213
      %s214 = sphi 0, %s211
      %s215 = sphi 0, %s214
      %s231 = sphi 0, %s215
    $region4: #{base_model_nlp_forward.10} parent=1 // loop_header_branch
      %26 = sbr.rel (%p24) target = $region8
    $region5: #{base_model_nlp_forward.10} parent=1 // loop_body
      %s28 = ssub.s32 %s23, 1
      %s29 = ssub.s32 %s23, 2
      %s42 = sadd.s32 1, %s33
      %p43 = scmp.ge.s32.totalorder %s42, 1
      %s44 = scalar_select %p43, 0, %s42
      %s45 = sadd.s32 1, %s32
      %s46 = scalar_select %p43, %s45, %s32
      %p47 = scmp.ge.s32.totalorder %s46, 1
      %s48 = scalar_select %p47, 0, %s46
      %s49 = sadd.s32 1, %s31
      %s50 = scalar_select %p47, %s49, %s31
      %p51 = scmp.ge.s32.totalorder %s50, 2
      %s52 = scalar_select %p51, 0, %s50
      %s53 = sadd.s32 1, %s30
      %s54 = scalar_select %p51, %s53, %s30
      %p55 = scmp.ge.s32.totalorder %s54, 4
      %s56 = scalar_select %p55, 0, %s54
      %s57 = ssub.s32 %s30, %s56
      %s58 = ssub.s32 %s31, %s52
      %s59 = sor.u32 %s57, %s58
      %s60 = ssub.s32 %s32, %s48
      %s61 = sor.u32 %s59, %s60
      %p62 = scmp.eq.s32.totalorder %s61, 0
      %s64 = sadd.s32 %s63, 1
      %s65 = scalar_select %p62, %s63, %s64
      %p68 = pneg %p62
      %p69 = scmp.eq.s32.totalorder %s23, 7
      %p70 = por %p68, %p69
      %p71 = scmp.ne.s32.totalorder %s63, %s66
      %p72 = scmp.eq.s32.totalorder %s23, 0
      %p73 = por %p71, %p72
      %p74 = scmp.ne.s32.totalorder %s63, %s66
      %p75 = scmp.eq.s32.totalorder %s28, 7
      %p76 = por %p74, %p75
      %p77 = scmp.ne.s32.totalorder %s66, %s67
      %p78 = scmp.eq.s32.totalorder %s28, 0
      %p79 = por %p77, %p78
      %p80 = scmp.ne.s32.totalorder %s66, %s67
      %p81 = scmp.eq.s32.totalorder %s29, 7
      %p82 = por %p80, %p81
      %p84 = scmp.ne.s32.totalorder %s67, %s83
      %p85 = scmp.eq.s32.totalorder %s29, 0
      %p86 = por %p84, %p85
      %s87 = ssub.s32 %s30, %s56
      %s88 = ssub.s32 %s31, %s52
      %s89 = sor.u32 %s87, %s88
      %s90 = ssub.s32 %s33, %s44
      %s91 = sor.u32 %s89, %s90
      %p92 = scmp.eq.s32.totalorder %s91, 0
      %s94 = sadd.s32 %s93, 1
      %s95 = scalar_select %p92, %s93, %s94
      %p98 = pneg %p92
      %p99 = scmp.eq.s32.totalorder %s23, 7
      %p100 = por %p98, %p99
      %p101 = scmp.ne.s32.totalorder %s93, %s96
      %p102 = scmp.eq.s32.totalorder %s23, 0
      %p103 = por %p101, %p102
      %p104 = scmp.ne.s32.totalorder %s93, %s96
      %p105 = scmp.eq.s32.totalorder %s28, 7
      %p106 = por %p104, %p105
      %p107 = scmp.ne.s32.totalorder %s96, %s97
      %p108 = scmp.eq.s32.totalorder %s28, 0
      %p109 = por %p107, %p108
      %p110 = scmp.ne.s32.totalorder %s96, %s97
      %p111 = scmp.eq.s32.totalorder %s29, 7
      %p112 = por %p110, %p111
      %p114 = scmp.ne.s32.totalorder %s97, %s113
      %p115 = scmp.eq.s32.totalorder %s29, 0
      %p116 = por %p114, %p115
      %s117 = ssub.s32 %s30, %s56
      %s118 = ssub.s32 %s31, %s52
      %s119 = sor.u32 %s117, %s118
      %s120 = ssub.s32 %s33, %s44
      %s121 = sor.u32 %s119, %s120
      %p122 = scmp.eq.s32.totalorder %s121, 0
      %s124 = sadd.s32 %s123, 1
      %s125 = scalar_select %p122, %s123, %s124
      %p128 = pneg %p122
      %p129 = scmp.eq.s32.totalorder %s23, 7
      %p130 = por %p128, %p129
      %p131 = scmp.ne.s32.totalorder %s123, %s126
      %p132 = scmp.eq.s32.totalorder %s23, 0
      %p133 = por %p131, %p132
      %p134 = scmp.ne.s32.totalorder %s123, %s126
      %p135 = scmp.eq.s32.totalorder %s28, 7
      %p136 = por %p134, %p135
      %p137 = scmp.ne.s32.totalorder %s126, %s127
      %p138 = scmp.eq.s32.totalorder %s28, 0
      %p139 = por %p137, %p138
      %p140 = scmp.ne.s32.totalorder %s126, %s127
      %p141 = scmp.eq.s32.totalorder %s29, 7
      %p142 = por %p140, %p141
      %p144 = scmp.ne.s32.totalorder %s127, %s143
      %p145 = scmp.eq.s32.totalorder %s29, 0
      %p146 = por %p144, %p145
      %s147 = ssub.s32 %s30, %s56
      %s148 = ssub.s32 %s32, %s48
      %s149 = sor.u32 %s147, %s148
      %s150 = ssub.s32 %s33, %s44
      %s151 = sor.u32 %s149, %s150
      %p152 = scmp.eq.s32.totalorder %s151, 0
      %s154 = sadd.s32 %s153, 1
      %s155 = scalar_select %p152, %s153, %s154
      %p158 = pneg %p152
      %p159 = scmp.eq.s32.totalorder %s23, 7
      %p160 = por %p158, %p159
      %p161 = scmp.ne.s32.totalorder %s153, %s156
      %p162 = scmp.eq.s32.totalorder %s23, 0
      %p163 = por %p161, %p162
      %p164 = scmp.ne.s32.totalorder %s153, %s156
      %p165 = scmp.eq.s32.totalorder %s28, 7
      %p166 = por %p164, %p165
      %p167 = scmp.ne.s32.totalorder %s156, %s157
      %p168 = scmp.eq.s32.totalorder %s28, 0
      %p169 = por %p167, %p168
      %p170 = scmp.ne.s32.totalorder %s156, %s157
      %p171 = scmp.eq.s32.totalorder %s29, 7
      %p172 = por %p170, %p171
      %p174 = scmp.ne.s32.totalorder %s157, %s173
      %p175 = scmp.eq.s32.totalorder %s29, 0
      %p176 = por %p174, %p175
      %s177 = ssub.s32 %s31, %s52
      %s178 = ssub.s32 %s33, %s44
      %s179 = sor.u32 %s177, %s178
      %p180 = scmp.eq.s32.totalorder %s179, 0
      %s182 = sadd.s32 %s181, 1
      %s183 = scalar_select %p180, %s181, %s182
      %p186 = pneg %p180
      %p187 = scmp.eq.s32.totalorder %s23, 7
      %p188 = por %p186, %p187
      %p189 = scmp.ne.s32.totalorder %s181, %s184
      %p190 = scmp.eq.s32.totalorder %s23, 0
      %p191 = por %p189, %p190
      %p192 = scmp.ne.s32.totalorder %s181, %s184
      %p193 = scmp.eq.s32.totalorder %s28, 7
      %p194 = por %p192, %p193
      %p195 = scmp.ne.s32.totalorder %s184, %s185
      %p196 = scmp.eq.s32.totalorder %s28, 0
      %p197 = por %p195, %p196
      %p198 = scmp.ne.s32.totalorder %s184, %s185
      %p199 = scmp.eq.s32.totalorder %s29, 7
      %p200 = por %p198, %p199
      %p202 = scmp.ne.s32.totalorder %s185, %s201
      %p203 = scmp.eq.s32.totalorder %s29, 0
      %p204 = por %p202, %p203
      %s205 = ssub.s32 %s30, %s56
      %s206 = ssub.s32 %s31, %s52
      %s207 = sor.u32 %s205, %s206
      %s208 = ssub.s32 %s32, %s48
      %s209 = sor.u32 %s207, %s208
      %p210 = scmp.eq.s32.totalorder %s209, 0
      %s212 = sadd.s32 %s211, 1
      %s213 = scalar_select %p210, %s211, %s212
      %p216 = pneg %p210
      %p217 = scmp.eq.s32.totalorder %s23, 7
      %p218 = por %p216, %p217
      %p219 = scmp.ne.s32.totalorder %s211, %s214
      %p220 = scmp.eq.s32.totalorder %s23, 0
      %p221 = por %p219, %p220
      %p222 = scmp.ne.s32.totalorder %s211, %s214
      %p223 = scmp.eq.s32.totalorder %s28, 7
      %p224 = por %p222, %p223
      %p225 = scmp.ne.s32.totalorder %s214, %s215
      %p226 = scmp.eq.s32.totalorder %s28, 0
      %p227 = por %p225, %p226
      %p228 = scmp.ne.s32.totalorder %s214, %s215
      %p229 = scmp.eq.s32.totalorder %s29, 7
      %p230 = por %p228, %p229
      %p232 = scmp.ne.s32.totalorder %s215, %s231
      %p233 = scmp.eq.s32.totalorder %s29, 0
      %p234 = por %p232, %p233
      %p235 = scmp.le.s32.totalorder 1, %s23
      %p236 = scmp.lt.s32.totalorder %s23, 9
      %p237 = pnand %p235, %p236
      %p238 = pneg %p237
      // Predicated region
      $region9: #{base_model_nlp_forward.10} parent=5 // pred_check
        _
      $region10: #{base_model_nlp_forward.10} parent=5 // pred_check_branch
        %240 = sbr.rel (%p237) target = $region12
      $region11: #{base_model_nlp_forward.10} parent=5 // pred_region
        %s241 = ssub.s32 %s23, 1
      $region12: #{base_model_nlp_forward.10} parent=5 // pred_fallthru
        _
      %p242 = scmp.lt.s32.totalorder %s23, 8
      // Predicated region
      $region13: #{base_model_nlp_forward.10} parent=5 // pred_check
        %p243 = pneg %p242
      $region14: #{base_model_nlp_forward.10} parent=5 // pred_check_branch
        %245 = sbr.rel (%p243) target = $region16
      $region15: #{base_model_nlp_forward.10} parent=5 // pred_region
        // Predicated region
        $region17: #{base_model_nlp_forward.10} parent=15 // pred_check
          %p246 = pneg %p73
        $region18: #{base_model_nlp_forward.10} parent=15 // pred_check_branch
          %248 = sbr.rel (%p246) target = $region20
        $region19: #{base_model_nlp_forward.10} parent=15 // pred_region
          %s249 = sand.u32 %s63, 1
          %s250 = scalar_lea.sflag [#allocation6], %s249
          %s251 = sand.u32 %s63, 1
          %s252 = smul.addr %s251, 4
          %s253 = scalar_lea.vmem [#allocation5], %s252
          %s255 = ssub.s32 64, 64
          %256 = vsyncadd %s250, %s255
          %s257 = sadd.s32 %s32, %s31
          %s258 = smul.addr %s30, 2
          %s259 = sadd.s32 %s257, %s258
          %s260 = smul.addr %s259, 64
          %s261 = scalar_lea.hbm %s0, %s260
          %s263 = sshll.u32 %s253, 4
          %s264 = int_to_ptr.vmem [resolvable:$true] %s263
          %266 = dma.hbm_to_vmem [thread:$0]  %s261, 64, %s264, %s250
        $region20: #{base_model_nlp_forward.10} parent=15 // pred_fallthru
          _
        // Predicated region
        $region21: #{base_model_nlp_forward.10} parent=15 // pred_check
          %p267 = pneg %p103
        $region22: #{base_model_nlp_forward.10} parent=15 // pred_check_branch
          %269 = sbr.rel (%p267) target = $region24
        $region23: #{base_model_nlp_forward.10} parent=15 // pred_region
          %s270 = sand.u32 %s23, 1
          %s271 = scalar_lea.sflag [#allocation9], %s270
          %s272 = sand.u32 %s93, 1
          %s273 = smul.addr %s272, 4
          %s274 = scalar_lea.vmem [#allocation8], %s273
          %s276 = ssub.s32 64, 64
          %277 = vsyncadd %s271, %s276
          %s278 = sadd.s32 %s33, %s31
          %s279 = smul.addr %s30, 2
          %s280 = sadd.s32 %s278, %s279
          %s281 = sadd.s32 %s280, 8
          %s282 = smul.addr %s281, 64
          %s283 = scalar_lea.hbm %s1, %s282
          %s285 = sshll.u32 %s274, 4
          %s286 = int_to_ptr.vmem [resolvable:$true] %s285
          %288 = dma.hbm_to_vmem [thread:$0]  %s283, 64, %s286, %s271
        $region24: #{base_model_nlp_forward.10} parent=15 // pred_fallthru
          _
        // Predicated region
        $region25: #{base_model_nlp_forward.10} parent=15 // pred_check
          %p289 = pneg %p133
        $region26: #{base_model_nlp_forward.10} parent=15 // pred_check_branch
          %291 = sbr.rel (%p289) target = $region28
        $region27: #{base_model_nlp_forward.10} parent=15 // pred_region
          %s292 = sand.u32 %s23, 1
          %s293 = scalar_lea.sflag [#allocation9], %s292
          %s294 = sand.u32 %s123, 1
          %s295 = smul.addr %s294, 4
          %s296 = scalar_lea.vmem [#allocation10], %s295
          %s298 = ssub.s32 64, 64
          %299 = vsyncadd %s293, %s298
          %s300 = sadd.s32 %s33, %s31
          %s301 = smul.addr %s30, 2
          %s302 = sadd.s32 %s300, %s301
          %s303 = sadd.s32 %s302, 16
          %s304 = smul.addr %s303, 64
          %s305 = scalar_lea.hbm %s2, %s304
          %s307 = sshll.u32 %s296, 4
          %s308 = int_to_ptr.vmem [resolvable:$true] %s307
          %310 = dma.hbm_to_vmem [thread:$0]  %s305, 64, %s308, %s293
        $region28: #{base_model_nlp_forward.10} parent=15 // pred_fallthru
          _
        // Predicated region
        $region29: #{base_model_nlp_forward.10} parent=15 // pred_check
          %p311 = pneg %p163
        $region30: #{base_model_nlp_forward.10} parent=15 // pred_check_branch
          %313 = sbr.rel (%p311) target = $region32
        $region31: #{base_model_nlp_forward.10} parent=15 // pred_region
          %s314 = sand.u32 %s23, 1
          %s315 = scalar_lea.sflag [#allocation12], %s314
          %s316 = sand.u32 %s153, 1
          %s317 = smul.addr %s316, 8
          %s318 = scalar_lea.vmem [#allocation11], %s317
          %s320 = ssub.s32 128, 128
          %321 = vsyncadd %s315, %s320
          %s322 = sadd.s32 %s33, %s32
          %s323 = sadd.s32 %s322, %s30
          %s324 = smul.addr %s323, 128
          %s325 = scalar_lea.hbm %s3, %s324
          %s327 = sshll.u32 %s318, 4
          %s328 = int_to_ptr.vmem [resolvable:$true] %s327
          %330 = dma.hbm_to_vmem [thread:$0]  %s325, 128, %s328, %s315
        $region32: #{base_model_nlp_forward.10} parent=15 // pred_fallthru
          _
        // Predicated region
        $region33: #{base_model_nlp_forward.10} parent=15 // pred_check
          %p331 = pneg %p191
        $region34: #{base_model_nlp_forward.10} parent=15 // pred_check_branch
          %333 = sbr.rel (%p331) target = $region36
        $region35: #{base_model_nlp_forward.10} parent=15 // pred_region
          %s334 = sand.u32 %s23, 1
          %s335 = scalar_lea.sflag [#allocation12], %s334
          %s336 = sand.u32 %s181, 1
          %s337 = scalar_lea.vmem [#allocation13], %s336
          %s339 = ssub.s32 16, 16
          %340 = vsyncadd %s335, %s339
          %s341 = sadd.s32 %s33, %s31
          %s342 = smul.addr %s341, 16
          %s343 = scalar_lea.hbm %s4, %s342
          %s345 = sshll.u32 %s337, 4
          %s346 = int_to_ptr.vmem [resolvable:$true] %s345
          %348 = dma.hbm_to_vmem [thread:$0]  %s343, 16, %s346, %s335
        $region36: #{base_model_nlp_forward.10} parent=15 // pred_fallthru
          _
      $region16: #{base_model_nlp_forward.10} parent=5 // pred_fallthru
        _
      %p349 = scmp.le.s32.totalorder 1, %s23
      %p350 = scmp.lt.s32.totalorder %s23, 9
      %p351 = pnand %p349, %p350
      %p352 = pneg %p351
      // Predicated region
      $region37: #{base_model_nlp_forward.10} parent=5 // pred_check
        _
      $region38: #{base_model_nlp_forward.10} parent=5 // pred_check_branch
        %354 = sbr.rel (%p351) target = $region40
      $region39: #{base_model_nlp_forward.10} parent=5 // pred_region
        %s355 = ssub.s32 %s23, 1
        %s356 = sand.u32 %s66, 1
        %s357 = scalar_lea.sflag [#allocation6], %s356
        %s358 = sand.u32 %s66, 1
        %s359 = smul.addr %s358, 4
        %s360 = scalar_lea.vmem [#allocation5], %s359
        // Predicated region
        $region41: #{base_model_nlp_forward.10} parent=39 // pred_check
          %p361 = pneg %p79
        $region42: #{base_model_nlp_forward.10} parent=39 // pred_check_branch
          %363 = sbr.rel (%p361) target = $region44
        $region43: #{base_model_nlp_forward.10} parent=39 // pred_region
          %364 = dma.done %s357, 64
        $region44: #{base_model_nlp_forward.10} parent=39 // pred_fallthru
          _
        %s365 = sand.u32 %s28, 1
        %s366 = scalar_lea.sflag [#allocation9], %s365
        %s367 = sand.u32 %s96, 1
        %s368 = smul.addr %s367, 4
        %s369 = scalar_lea.vmem [#allocation8], %s368
        // Predicated region
        $region45: #{base_model_nlp_forward.10} parent=39 // pred_check
          %p370 = pneg %p109
        $region46: #{base_model_nlp_forward.10} parent=39 // pred_check_branch
          %372 = sbr.rel (%p370) target = $region48
        $region47: #{base_model_nlp_forward.10} parent=39 // pred_region
          %373 = dma.done %s366, 64
        $region48: #{base_model_nlp_forward.10} parent=39 // pred_fallthru
          _
        %s374 = sand.u32 %s28, 1
        %s375 = scalar_lea.sflag [#allocation9], %s374
        %s376 = sand.u32 %s126, 1
        %s377 = smul.addr %s376, 4
        %s378 = scalar_lea.vmem [#allocation10], %s377
        // Predicated region
        $region49: #{base_model_nlp_forward.10} parent=39 // pred_check
          %p379 = pneg %p139
        $region50: #{base_model_nlp_forward.10} parent=39 // pred_check_branch
          %381 = sbr.rel (%p379) target = $region52
        $region51: #{base_model_nlp_forward.10} parent=39 // pred_region
          %382 = dma.done %s375, 64
        $region52: #{base_model_nlp_forward.10} parent=39 // pred_fallthru
          _
        %s383 = sand.u32 %s28, 1
        %s384 = scalar_lea.sflag [#allocation12], %s383
        %s385 = sand.u32 %s156, 1
        %s386 = smul.addr %s385, 8
        %s387 = scalar_lea.vmem [#allocation11], %s386
        // Predicated region
        $region53: #{base_model_nlp_forward.10} parent=39 // pred_check
          %p388 = pneg %p169
        $region54: #{base_model_nlp_forward.10} parent=39 // pred_check_branch
          %390 = sbr.rel (%p388) target = $region56
        $region55: #{base_model_nlp_forward.10} parent=39 // pred_region
          %391 = dma.done %s384, 128
        $region56: #{base_model_nlp_forward.10} parent=39 // pred_fallthru
          _
        %s392 = sand.u32 %s28, 1
        %s393 = scalar_lea.sflag [#allocation12], %s392
        %s394 = sand.u32 %s184, 1
        %s395 = scalar_lea.vmem [#allocation13], %s394
        // Predicated region
        $region57: #{base_model_nlp_forward.10} parent=39 // pred_check
          %p396 = pneg %p197
        $region58: #{base_model_nlp_forward.10} parent=39 // pred_check_branch
          %398 = sbr.rel (%p396) target = $region60
        $region59: #{base_model_nlp_forward.10} parent=39 // pred_region
          %399 = dma.done %s393, 16
        $region60: #{base_model_nlp_forward.10} parent=39 // pred_fallthru
          _
        %s400 = sand.u32 %s66, 1
        %s401 = scalar_lea.sflag [#allocation6], %s400
        %s402 = sand.u32 %s66, 1
        %s403 = smul.addr %s402, 4
        %s404 = scalar_lea.vmem [#allocation5], %s403
        %p405 = pneg %p79
        %p406 = pneg %p76
        %s407 = sand.u32 %s28, 1
        %s408 = scalar_lea.sflag [#allocation9], %s407
        %s409 = sand.u32 %s96, 1
        %s410 = smul.addr %s409, 4
        %s411 = scalar_lea.vmem [#allocation8], %s410
        %p412 = pneg %p109
        %p413 = pneg %p106
        %s414 = sand.u32 %s28, 1
        %s415 = scalar_lea.sflag [#allocation9], %s414
        %s416 = sand.u32 %s126, 1
        %s417 = smul.addr %s416, 4
        %s418 = scalar_lea.vmem [#allocation10], %s417
        %p419 = pneg %p139
        %p420 = pneg %p136
        %s421 = sand.u32 %s28, 1
        %s422 = scalar_lea.sflag [#allocation12], %s421
        %s423 = sand.u32 %s156, 1
        %s424 = smul.addr %s423, 8
        %s425 = scalar_lea.vmem [#allocation11], %s424
        %p426 = pneg %p169
        %p427 = pneg %p166
        %s428 = sand.u32 %s28, 1
        %s429 = scalar_lea.sflag [#allocation12], %s428
        %s430 = sand.u32 %s184, 1
        %s431 = scalar_lea.vmem [#allocation13], %s430
        %p432 = pneg %p197
        %p433 = pneg %p194
        %p434 = pneg %p227
        %p435 = pneg %p224
        %s436 = sand.u32 %s214, 1
        %s437 = scalar_lea.sflag [#allocation7], %s436
        %s438 = sand.u32 %s214, 1
        %s439 = smul.addr %s438, 4
        %s440 = scalar_lea.vmem [#allocation14], %s439
        %p442 = scmp.eq.s32.totalorder %s37, 0
        // Predicated region
        $region61: #{base_model_nlp_forward.10} parent=39 // pred_check
          %p443 = pneg %p442
        $region62: #{base_model_nlp_forward.10} parent=39 // pred_check_branch
          %445 = sbr.rel (%p443) target = $region64
        $region63: #{base_model_nlp_forward.10} parent=39 // pred_region
          %vm446 = vcmask 7168
          %447 = vst.msk [vmem:[#allocation2] sm:$0xff] %vm446, -inf
          %448 = vst.msk [vmem:[#allocation3] sm:$0xff] %vm446, 0.0
          %vm449 = vcmask 64512
          %450 = vst.msk [vmem:[#allocation4] sm:$0xff] %vm449, 0.0
        $region64: #{base_model_nlp_forward.10} parent=39 // pred_fallthru
          _
        %v451 = vld [vmem:[%s360] sm:$0xf]
        %v452 = vld [vmem:[%s369] sm:$0xf]
        %v453 = vld [vmem:[%s387] sm:$0xff]
        %vm454 = vcmask 64512
        %v456 = vsel %vm454, %v451, 0
        %v459 = vsel %vm454, %v452, 0
        %461 = vmatprep.subr.bf16.mxu0 0
        %462 = vmatpush1.bf16.xpose.msra.mxu0 %v459
        %463 = vmatprep.subr.bf16.mxu0 0
        %464 = vmatpush1.bf16.xpose.msra.mxu0 0
        %465 = vmatprep.subr.bf16.mxu0 0
        %466 = vmatpush1.bf16.xpose.msra.mxu0 0
        %467 = vmatprep.subr.bf16.mxu0 0
        %468 = vmatpush1.bf16.xpose.msra.mxu0 0
        %469 = vmatprep.subr.bf16.mxu0 0
        %470 = vmatpush1.bf16.xpose.msra.mxu0 0
        %471 = vmatprep.subr.bf16.mxu0 0
        %472 = vmatpush1.bf16.xpose.msra.mxu0 0
        %473 = vmatprep.subr.bf16.mxu0 0
        %474 = vmatpush1.bf16.xpose.msra.mxu0 0
        %475 = vmatprep.subr.bf16.mxu0 0
        %476 = vmatpush1.bf16.xpose.msra.mxu0 0
        %477 = vmatprep.subr.bf16.mxu0 0
        %478 = vmatpush1.bf16.xpose.msra.mxu0 0
        %479 = vmatprep.subr.bf16.mxu0 0
        %480 = vmatpush1.bf16.xpose.msra.mxu0 0
        %481 = vmatprep.subr.bf16.mxu0 0
        %482 = vmatpush1.bf16.xpose.msra.mxu0 0
        %483 = vmatprep.subr.bf16.mxu0 0
        %484 = vmatpush1.bf16.xpose.msra.mxu0 0
        %485 = vmatprep.subr.bf16.mxu0 0
        %486 = vmatpush1.bf16.xpose.msra.mxu0 0
        %487 = vmatprep.subr.bf16.mxu0 0
        %488 = vmatpush1.bf16.xpose.msra.mxu0 0
        %489 = vmatprep.subr.bf16.mxu0 0
        %490 = vmatpush1.bf16.xpose.msra.mxu0 0
        %491 = vmatprep.subr.bf16.mxu0 0
        %492 = vmatpush1.bf16.xpose.msra.mxu0 0
        %493 = vmatprep.mubr.bf16.mxu0 0
        %494 = vmatmul.mubr.bf16.gmra.mrb[0].mxu0 %v456
        %v495 = vpop.f32.mrb[0].mxu0
        %v496 = vadd.f32 %v453, %v495
        %v497 = vpop.f32.mrb[0].mxu0
        %v498 = vpop.f32.mrb[0].mxu0
        %v499 = vpop.f32.mrb[0].mxu0
        %500 = vdwg.mxu0
        %v501 = vld [vmem:[%s395] sm:$0x1]
        %v503 = vlaneseq
        %v504 = vshrl.u32 %v503, 7
        %v505 = vsub.s32 0, %v504
        %v506 = vrot.slane %v501, %v505
        %v508 = vadd.f32 %v496, %v506
        %v509 = vld [vmem:[#allocation2] sm:$0xff]
        %v510 = vsel %vm454, %v508, -inf
        %511 = vmax.xlane.f32.xlu0 %v510
        %v512 = vpop.xlane.xlu0 %511
        %v513 = vmax.f32 %v509, %v512
        %v514 = vsub.f32 %v509, %v513
        %v515 = vmul.f32 %v514, 1.442695
        %v516 = vpow.pop %v515
        %518 = vset.pattern.permute.xlu0 0
        %519 = vperm.xlu0 %518, %v513
        %v520 = vpop.permute.xlu0 %519
        %v522 = vsub.f32 %v508, %v520
        %v523 = vmul.f32 %v522, 1.442695
        %v524 = vpow.pop %v523
        %v525 = vld [vmem:[#allocation3] sm:$0xff]
        %v526 = vmul.f32 %v516, %v525
        %v527 = vsel %vm454, %v524, 0.0
        %528 = vadd.xlane.f32.xlu0 %v527
        %v529 = vpop.xlane.xlu0 %528
        %v530 = vadd.f32 %v526, %v529
        %vm531 = vcmask 7168
        %532 = vst.msk [vmem:[#allocation3] sm:$0xff] %vm531, %v530
        %v533 = vld [vmem:[#allocation4] sm:$0xff]
        %535 = vset.pattern.permute.xlu0 0
        %536 = vperm.xlu0 %535, %v516
        %v537 = vpop.permute.xlu0 %536
        %v539 = vmul.f32 %v537, %v533
        %v540 = vpack.c.bf16 %v524, %v524
        %v541 = vld [vmem:[%s378] sm:$0xf]
        %v543 = vsel %vm454, %v540, 0
        %vm545 = vcmask 1043456
        %v547 = vsel %vm545, %v541, 0
        %549 = vmatprep.subr.bf16.mxu0 0
        %550 = vmatpush1.bf16.msra.mxu0 %v547
        %551 = vmatprep.subr.bf16.mxu0 0
        %552 = vmatpush1.bf16.msra.mxu0 0
        %553 = vmatprep.subr.bf16.mxu0 0
        %554 = vmatpush1.bf16.msra.mxu0 0
        %555 = vmatprep.subr.bf16.mxu0 0
        %556 = vmatpush1.bf16.msra.mxu0 0
        %557 = vmatprep.subr.bf16.mxu0 0
        %558 = vmatpush1.bf16.msra.mxu0 0
        %559 = vmatprep.subr.bf16.mxu0 0
        %560 = vmatpush1.bf16.msra.mxu0 0
        %561 = vmatprep.subr.bf16.mxu0 0
        %562 = vmatpush1.bf16.msra.mxu0 0
        %563 = vmatprep.subr.bf16.mxu0 0
        %564 = vmatpush1.bf16.msra.mxu0 0
        %565 = vmatprep.subr.bf16.mxu0 0
        %566 = vmatpush1.bf16.msra.mxu0 0
        %567 = vmatprep.subr.bf16.mxu0 0
        %568 = vmatpush1.bf16.msra.mxu0 0
        %569 = vmatprep.subr.bf16.mxu0 0
        %570 = vmatpush1.bf16.msra.mxu0 0
        %571 = vmatprep.subr.bf16.mxu0 0
        %572 = vmatpush1.bf16.msra.mxu0 0
        %573 = vmatprep.subr.bf16.mxu0 0
        %574 = vmatpush1.bf16.msra.mxu0 0
        %575 = vmatprep.subr.bf16.mxu0 0
        %576 = vmatpush1.bf16.msra.mxu0 0
        %577 = vmatprep.subr.bf16.mxu0 0
        %578 = vmatpush1.bf16.msra.mxu0 0
        %579 = vmatprep.subr.bf16.mxu0 0
        %580 = vmatpush1.bf16.msra.mxu0 0
        %581 = vmatprep.mubr.bf16.mxu0 0
        %582 = vmatmul.mubr.bf16.gmra.mrb[0].mxu0 %v543
        %v583 = vpop.f32.mrb[0].mxu0
        %v584 = vadd.f32 0.0, %v583
        %v585 = vpop.f32.mrb[0].mxu0
        %v586 = vpop.f32.mrb[0].mxu0
        %v587 = vpop.f32.mrb[0].mxu0
        %588 = vdwg.mxu0
        %v589 = vadd.f32 %v539, %v584
        %590 = vst.msk [vmem:[#allocation4] sm:$0xff] %vm454, %v589
        %591 = vst.msk [vmem:[#allocation2] sm:$0xff] %vm531, %v513
        // Predicated region
        $region65: #{base_model_nlp_forward.10} parent=39 // pred_check
          %p592 = pneg %p442
        $region66: #{base_model_nlp_forward.10} parent=39 // pred_check_branch
          %594 = sbr.rel (%p592) target = $region68
        $region67: #{base_model_nlp_forward.10} parent=39 // pred_region
          %v595 = vld [vmem:[#allocation4] sm:$0xff]
          %v596 = vld [vmem:[#allocation3] sm:$0xff]
          %v597 = vrcp.pop %v596
          %599 = vset.pattern.permute.xlu0 0
          %600 = vperm.xlu0 %599, %v597
          %v601 = vpop.permute.xlu0 %600
          %v603 = vmul.f32 %v595, %v601
          %v604 = vpack.c.bf16 %v603, %v603
          %vm605 = vcmask 60416
          %606 = vst.msk [vmem:[%s440] sm:$0xf] %vm605, %v604
        $region68: #{base_model_nlp_forward.10} parent=39 // pred_fallthru
          _
        %s607 = sand.u32 %s214, 1
        %s608 = scalar_lea.sflag [#allocation7], %s607
        %s609 = sand.u32 %s214, 1
        %s610 = smul.addr %s609, 4
        %s611 = scalar_lea.vmem [#allocation14], %s610
        // Predicated region
        $region69: #{base_model_nlp_forward.10} parent=39 // pred_check
          %p612 = pneg %p224
        $region70: #{base_model_nlp_forward.10} parent=39 // pred_check_branch
          %614 = sbr.rel (%p612) target = $region72
        $region71: #{base_model_nlp_forward.10} parent=39 // pred_region
          %s616 = ssub.s32 64, 64
          %617 = vsyncadd %s608, %s616
          %s618 = sadd.s32 %s36, %s35
          %s619 = smul.addr %s34, 2
          %s620 = sadd.s32 %s618, %s619
          %s621 = smul.addr %s620, 64
          %s622 = scalar_lea.hbm %s5, %s621
          %s624 = sshll.u32 %s611, 4
          %s625 = int_to_ptr.vmem [resolvable:$true] %s624
          %627 = dma.vmem_to_hbm [thread:$0]  %s625, 64, %s622, %s608
        $region72: #{base_model_nlp_forward.10} parent=39 // pred_fallthru
          _
      $region40: #{base_model_nlp_forward.10} parent=5 // pred_fallthru
        _
      %p628 = scmp.le.s32.totalorder 2, %s23
      // Predicated region
      $region73: #{base_model_nlp_forward.10} parent=5 // pred_check
        %p629 = pneg %p628
      $region74: #{base_model_nlp_forward.10} parent=5 // pred_check_branch
        %631 = sbr.rel (%p629) target = $region76
      $region75: #{base_model_nlp_forward.10} parent=5 // pred_region
        %s632 = ssub.s32 %s23, 2
        // Predicated region
        $region77: #{base_model_nlp_forward.10} parent=75 // pred_check
          %p633 = pneg %p230
        $region78: #{base_model_nlp_forward.10} parent=75 // pred_check_branch
          %635 = sbr.rel (%p633) target = $region80
        $region79: #{base_model_nlp_forward.10} parent=75 // pred_region
          %s636 = sand.u32 %s215, 1
          %s637 = scalar_lea.sflag [#allocation7], %s636
          %s638 = sand.u32 %s215, 1
          %s639 = smul.addr %s638, 4
          %s640 = scalar_lea.vmem [#allocation14], %s639
          %641 = dma.done %s637, 64
        $region80: #{base_model_nlp_forward.10} parent=75 // pred_fallthru
          _
      $region76: #{base_model_nlp_forward.10} parent=5 // pred_fallthru
        _
    $region6: #{base_model_nlp_forward.10} parent=1 // loop_footer
      %s27 = sadd.s32 1, %s23
    $region7: #{base_model_nlp_forward.10} parent=1 // loop_footer_branch
      %22 = sbr.rel target = $region3
    $region8: #{base_model_nlp_forward.10} parent=1 // loop_exit
      _
    %642 = vsyncpa [#allocation6], 1
    %s643 = scalar_lea.sflag [#allocation6], 1
    %644 = vsyncpa %s643, 1
    %645 = vsyncpa [#allocation9], 1
    %s646 = scalar_lea.sflag [#allocation9], 1
    %647 = vsyncpa %s646, 1
    %648 = vsyncpa [#allocation12], 1
    %s649 = scalar_lea.sflag [#allocation12], 1
    %650 = vsyncpa %s649, 1
    %651 = vsyncpa [#allocation7], 1
    %s652 = scalar_lea.sflag [#allocation7], 1
    %653 = vsyncpa %s652, 1

// kernel: base_model_nlp_forward.12
$region0: #{base_model_nlp_forward.12}
  #allocation0 [shape = 'u32[]', space=smem, size = 0x4, offset = 0x4, fixed_abs, tag = 'smem constant byte address 0x4 - core index']
  #allocation1 [shape = 'u32[144,128]{1,0:T(1,128)}', space=vmem, size = 0x12000, scoped, tag = 'internal scratch']
  #allocation2 [shape = 'bf16[16,32]{1,0:T(16,128)(2,1)}', space=vmem, size = 0x1000, scoped, tag = 'scratch operand']
  #allocation3 [shape = 'f32[16,32]{1,0:T(8,128)}', space=vmem, size = 0x2000, scoped, tag = 'scratch operand']
  %s0 = inlined_call_operand.hbm [shape: f32[16,32], index: 0, kind: input, shape index: {}]
  %s1 = inlined_call_operand.hbm [shape: f32[1,32], index: 1, kind: input, shape index: {}]
  %s2 = inlined_call_operand.hbm [shape: bf16[32,64], index: 2, kind: input, shape index: {}]
  %s3 = inlined_call_operand.hbm [shape: bf16[64,32], index: 3, kind: input, shape index: {}]
  %s4 = inlined_call_operand.hbm [shape: f32[16,32], index: 4, kind: output, shape index: {}]
  %s5 = sld [smem:[#allocation0]]
  $region50: #{base_model_nlp_forward.12} parent=0
    _
  %s7 = ssub.s32 1, %s5
  %s8 = scalar_select 0, %s7, %s5
  $region1: #{base_model_nlp_forward.12} parent=0
    #allocation4 [shape = 'u8[8192]{0}', space=vmem, size = 0x2000, scoped, tag = 'input window, operand 0, single buffered']
    #allocation5 [shape = 's32[1]{0}', space=sflag, size = 0x4, scoped, tag = 'scoped memory for base_model_nlp_forward.12']
    #allocation6 [shape = 's32[1]{0}', space=sflag, size = 0x4, scoped, tag = 'scoped memory for base_model_nlp_forward.12']
    #allocation7 [shape = 'u8[512]{0}', space=vmem, size = 0x400, scoped, tag = 'input window, operand 1, single buffered']
    #allocation8 [shape = 's32[1]{0}', space=sflag, size = 0x4, scoped, tag = 'scoped memory for base_model_nlp_forward.12']
    #allocation9 [shape = 'u8[8192]{0}', space=vmem, size = 0x2000, scoped, tag = 'input window, operand 2, single buffered']
    #allocation10 [shape = 'u8[16384]{0}', space=vmem, size = 0x4000, scoped, tag = 'input window, operand 3, single buffered']
    #allocation11 [shape = 's32[1]{0}', space=sflag, size = 0x4, scoped, tag = 'scoped memory for base_model_nlp_forward.12']
    #allocation12 [shape = 'u8[8192]{0}', space=vmem, size = 0x2000, scoped, tag = 'output window, operand 0, single buffered']
    %9 = vsyncpa [#allocation5], 0
    %10 = vsyncpa [#allocation8], 0
    %11 = vsyncpa [#allocation11], 0
    %12 = vsyncpa [#allocation6], 0
    // Predicated region
    $region2: #{base_model_nlp_forward.12} parent=1 // pred_check
      _
    $region3: #{base_model_nlp_forward.12} parent=1 // pred_check_branch
      %14 = sbr.rel (0) target = $region5
    $region4: #{base_model_nlp_forward.12} parent=1 // pred_region
      %s16 = ssub.s32 256, 256
      %17 = vsyncadd [#allocation5], %s16
      %s18 = sshll.u32 [#allocation4], 4
      %s19 = int_to_ptr.vmem [resolvable:$true] %s18
      %24 = dma.hbm_to_vmem [thread:$0]  %s0, 256, %s19, [#allocation5], 128, 128, 8
    $region5: #{base_model_nlp_forward.12} parent=1 // pred_fallthru
      _
    // Predicated region
    $region6: #{base_model_nlp_forward.12} parent=1 // pred_check
      _
    $region7: #{base_model_nlp_forward.12} parent=1 // pred_check_branch
      %26 = sbr.rel (0) target = $region9
    $region8: #{base_model_nlp_forward.12} parent=1 // pred_region
      %s28 = ssub.s32 16, 16
      %29 = vsyncadd [#allocation8], %s28
      %s31 = sshll.u32 [#allocation7], 4
      %s32 = int_to_ptr.vmem [resolvable:$true] %s31
      %34 = dma.hbm_to_vmem [thread:$0]  %s1, 16, %s32, [#allocation8]
    $region9: #{base_model_nlp_forward.12} parent=1 // pred_fallthru
      _
    // Predicated region
    $region10: #{base_model_nlp_forward.12} parent=1 // pred_check
      _
    $region11: #{base_model_nlp_forward.12} parent=1 // pred_check_branch
      %36 = sbr.rel (0) target = $region13
    $region12: #{base_model_nlp_forward.12} parent=1 // pred_region
      %s38 = ssub.s32 256, 256
      %39 = vsyncadd [#allocation8], %s38
      %s40 = sshll.u32 [#allocation9], 4
      %s41 = int_to_ptr.vmem [resolvable:$true] %s40
      %46 = dma.hbm_to_vmem [thread:$0]  %s2, 256, %s41, [#allocation8], 64, 64, 4
    $region13: #{base_model_nlp_forward.12} parent=1 // pred_fallthru
      _
    // Predicated region
    $region14: #{base_model_nlp_forward.12} parent=1 // pred_check
      _
    $region15: #{base_model_nlp_forward.12} parent=1 // pred_check_branch
      %48 = sbr.rel (0) target = $region17
    $region16: #{base_model_nlp_forward.12} parent=1 // pred_region
      %s50 = ssub.s32 512, 512
      %51 = vsyncadd [#allocation11], %s50
      %s52 = sshll.u32 [#allocation10], 4
      %s53 = int_to_ptr.vmem [resolvable:$true] %s52
      %58 = dma.hbm_to_vmem [thread:$0]  %s3, 512, %s53, [#allocation11], 64, 64, 4
    $region17: #{base_model_nlp_forward.12} parent=1 // pred_fallthru
      _
    // Predicated region
    $region18: #{base_model_nlp_forward.12} parent=1 // pred_check
      _
    $region19: #{base_model_nlp_forward.12} parent=1 // pred_check_branch
      %60 = sbr.rel (0) target = $region21
    $region20: #{base_model_nlp_forward.12} parent=1 // pred_region
      %61 = dma.done [#allocation5], 256
    $region21: #{base_model_nlp_forward.12} parent=1 // pred_fallthru
      _
    // Predicated region
    $region22: #{base_model_nlp_forward.12} parent=1 // pred_check
      _
    $region23: #{base_model_nlp_forward.12} parent=1 // pred_check_branch
      %63 = sbr.rel (0) target = $region25
    $region24: #{base_model_nlp_forward.12} parent=1 // pred_region
      %64 = dma.done [#allocation8], 16
    $region25: #{base_model_nlp_forward.12} parent=1 // pred_fallthru
      _
    // Predicated region
    $region26: #{base_model_nlp_forward.12} parent=1 // pred_check
      _
    $region27: #{base_model_nlp_forward.12} parent=1 // pred_check_branch
      %66 = sbr.rel (0) target = $region29
    $region28: #{base_model_nlp_forward.12} parent=1 // pred_region
      %67 = dma.done [#allocation8], 256
    $region29: #{base_model_nlp_forward.12} parent=1 // pred_fallthru
      _
    // Predicated region
    $region30: #{base_model_nlp_forward.12} parent=1 // pred_check
      _
    $region31: #{base_model_nlp_forward.12} parent=1 // pred_check_branch
      %69 = sbr.rel (0) target = $region33
    $region32: #{base_model_nlp_forward.12} parent=1 // pred_region
      %70 = dma.done [#allocation11], 512
    $region33: #{base_model_nlp_forward.12} parent=1 // pred_fallthru
      _
    %p72 = scmp.eq.s32.totalorder 0, 0
    // Predicated region
    $region34: #{base_model_nlp_forward.12} parent=1 // pred_check
      %p73 = pneg %p72
    $region35: #{base_model_nlp_forward.12} parent=1 // pred_check_branch
      %75 = sbr.rel (%p73) target = $region37
    $region36: #{base_model_nlp_forward.12} parent=1 // pred_region
      %v76 = vld [vmem:[#allocation4] sm:$0xff]
      %v77 = vld [vmem:[#allocation4 + $0x8] sm:$0xff]
      %v78 = vmul.f32 %v76, %v76
      %v79 = vmul.f32 %v77, %v77
      %vm80 = vcmask 261120
      %v81 = vsel %vm80, %v78, 0.0
      %82 = vadd.xlane.f32.xlu0 %v81
      %v83 = vpop.xlane.xlu0 %82
      %v84 = vsel %vm80, %v79, 0.0
      %85 = vadd.xlane.f32.xlu0 %v84
      %v86 = vpop.xlane.xlu0 %85
      %v87 = vrcp.pop 32.0
      %v88 = vmul.f32 %v83, %v87
      %v89 = vmul.f32 %v86, %v87
      %v90 = vadd.f32 %v88, 1e-06
      %v91 = vadd.f32 %v89, 1e-06
      %v92 = vrsqrt.pop %v90
      %v93 = vrsqrt.pop %v91
      %v94 = vmul.f32 %v76, %v92
      %v95 = vmul.f32 %v77, %v93
      %v96 = vld [vmem:[#allocation7] sm:$0x1]
      %v98 = vlaneseq
      %v99 = vshrl.u32 %v98, 7
      %v100 = vsub.s32 0, %v99
      %v101 = vrot.slane %v96, %v100
      %v103 = vmul.f32 %v94, %v101
      %v104 = vmul.f32 %v95, %v101
      %v105 = vpack.c.bf16 %v104, %v103
      %106 = vst.msk [vmem:[#allocation2] sm:$0xff] %vm80, %v105
      %107 = vst.msk [vmem:[#allocation3] sm:$0xff] %vm80, 0.0
      %108 = vst.msk [vmem:[#allocation3 + $0x8] sm:$0xff] %vm80, 0.0
    $region37: #{base_model_nlp_forward.12} parent=1 // pred_fallthru
      _
    %v109 = vld [vmem:[#allocation2] sm:$0xff]
    %v110 = vld [vmem:[#allocation9] sm:$0xf]
    %v111 = vld [vmem:[#allocation9 + $0x4] sm:$0xf]
    %v112 = vld [vmem:[#allocation9 + $0x8] sm:$0xf]
    %v113 = vld [vmem:[#allocation9 + $0xc] sm:$0xf]
    %v118 = vunpack.c.l.b16 %v110
    %v119 = vunpack.c.l.b16 %v111
    %v120 = vunpack.c.l.b16 %v112
    %v121 = vunpack.c.l.b16 %v113
    %v122 = vpack.c.b16 %v119, %v118
    %v123 = vpack.c.b16 %v121, %v120
    %vm126 = vcmask 261120
    %v128 = vsel %vm126, %v109, 0
    %130 = vmatprep.subr.bf16.mxu0 0
    %131 = vmatpush1.bf16.msra.mxu0 %v122
    %132 = vmatprep.subr.bf16.mxu0 0
    %133 = vmatpush1.bf16.msra.mxu0 %v123
    %134 = vmatprep.subr.bf16.mxu0 0
    %135 = vmatpush1.bf16.msra.mxu0 0
    %136 = vmatprep.subr.bf16.mxu0 0
    %137 = vmatpush1.bf16.msra.mxu0 0
    %138 = vmatprep.subr.bf16.mxu0 0
    %139 = vmatpush1.bf16.msra.mxu0 0
    %140 = vmatprep.subr.bf16.mxu0 0
    %141 = vmatpush1.bf16.msra.mxu0 0
    %142 = vmatprep.subr.bf16.mxu0 0
    %143 = vmatpush1.bf16.msra.mxu0 0
    %144 = vmatprep.subr.bf16.mxu0 0
    %145 = vmatpush1.bf16.msra.mxu0 0
    %146 = vmatprep.subr.bf16.mxu0 0
    %147 = vmatpush1.bf16.msra.mxu0 0
    %148 = vmatprep.subr.bf16.mxu0 0
    %149 = vmatpush1.bf16.msra.mxu0 0
    %150 = vmatprep.subr.bf16.mxu0 0
    %151 = vmatpush1.bf16.msra.mxu0 0
    %152 = vmatprep.subr.bf16.mxu0 0
    %153 = vmatpush1.bf16.msra.mxu0 0
    %154 = vmatprep.subr.bf16.mxu0 0
    %155 = vmatpush1.bf16.msra.mxu0 0
    %156 = vmatprep.subr.bf16.mxu0 0
    %157 = vmatpush1.bf16.msra.mxu0 0
    %158 = vmatprep.subr.bf16.mxu0 0
    %159 = vmatpush1.bf16.msra.mxu0 0
    %160 = vmatprep.subr.bf16.mxu0 0
    %161 = vmatpush1.bf16.msra.mxu0 0
    %162 = vmatprep.mubr.bf16.mxu0 0
    %163 = vmatmul.mubr.bf16.gmra.mrb[0].mxu0 %v128
    %v164 = vpop.f32.mrb[0].mxu0
    %v165 = vadd.f32 0.0, %v164
    %v166 = vpop.f32.mrb[0].mxu0
    %v167 = vpop.f32.mrb[0].mxu0
    %v168 = vadd.f32 0.0, %v167
    %v169 = vpop.f32.mrb[0].mxu0
    %170 = vdwg.mxu0
    %v171 = vmax.f32 %v165, 0.0
    %v172 = vmax.f32 %v168, 0.0
    %v173 = vpack.c.bf16 %v172, %v171
    %v174 = vld [vmem:[#allocation3] sm:$0xff]
    %v175 = vld [vmem:[#allocation3 + $0x8] sm:$0xff]
    %v176 = vld [vmem:[#allocation10] sm:$0xf]
    %v177 = vld [vmem:[#allocation10 + $0x4] sm:$0xf]
    %v178 = vld [vmem:[#allocation10 + $0x8] sm:$0xf]
    %v179 = vld [vmem:[#allocation10 + $0xc] sm:$0xf]
    %v180 = vld [vmem:[#allocation10 + $0x10] sm:$0xf]
    %v181 = vld [vmem:[#allocation10 + $0x14] sm:$0xf]
    %v182 = vld [vmem:[#allocation10 + $0x18] sm:$0xf]
    %v183 = vld [vmem:[#allocation10 + $0x1c] sm:$0xf]
    %v192 = vunpack.c.l.b16 %v176
    %v193 = vunpack.c.l.b16 %v177
    %v194 = vunpack.c.l.b16 %v178
    %v195 = vunpack.c.l.b16 %v179
    %v196 = vunpack.c.l.b16 %v180
    %v197 = vunpack.c.l.b16 %v181
    %v198 = vunpack.c.l.b16 %v182
    %v199 = vunpack.c.l.b16 %v183
    %v200 = vpack.c.b16 %v193, %v192
    %v201 = vpack.c.b16 %v195, %v194
    %v202 = vpack.c.b16 %v197, %v196
    %v203 = vpack.c.b16 %v199, %v198
    %vm208 = vcmask 523264
    %v210 = vsel %vm208, %v173, 0
    %212 = vmatprep.subr.bf16.mxu0 0
    %213 = vmatpush1.bf16.msra.mxu0 %v200
    %214 = vmatprep.subr.bf16.mxu0 0
    %215 = vmatpush1.bf16.msra.mxu0 %v201
    %216 = vmatprep.subr.bf16.mxu0 0
    %217 = vmatpush1.bf16.msra.mxu0 %v202
    %218 = vmatprep.subr.bf16.mxu0 0
    %219 = vmatpush1.bf16.msra.mxu0 %v203
    %220 = vmatprep.subr.bf16.mxu0 0
    %221 = vmatpush1.bf16.msra.mxu0 0
    %222 = vmatprep.subr.bf16.mxu0 0
    %223 = vmatpush1.bf16.msra.mxu0 0
    %224 = vmatprep.subr.bf16.mxu0 0
    %225 = vmatpush1.bf16.msra.mxu0 0
    %226 = vmatprep.subr.bf16.mxu0 0
    %227 = vmatpush1.bf16.msra.mxu0 0
    %228 = vmatprep.subr.bf16.mxu0 0
    %229 = vmatpush1.bf16.msra.mxu0 0
    %230 = vmatprep.subr.bf16.mxu0 0
    %231 = vmatpush1.bf16.msra.mxu0 0
    %232 = vmatprep.subr.bf16.mxu0 0
    %233 = vmatpush1.bf16.msra.mxu0 0
    %234 = vmatprep.subr.bf16.mxu0 0
    %235 = vmatpush1.bf16.msra.mxu0 0
    %236 = vmatprep.subr.bf16.mxu0 0
    %237 = vmatpush1.bf16.msra.mxu0 0
    %238 = vmatprep.subr.bf16.mxu0 0
    %239 = vmatpush1.bf16.msra.mxu0 0
    %240 = vmatprep.subr.bf16.mxu0 0
    %241 = vmatpush1.bf16.msra.mxu0 0
    %242 = vmatprep.subr.bf16.mxu0 0
    %243 = vmatpush1.bf16.msra.mxu0 0
    %244 = vmatprep.mubr.bf16.mxu0 0
    %245 = vmatmul.mubr.bf16.gmra.mrb[0].mxu0 %v210
    %v246 = vpop.f32.mrb[0].mxu0
    %v247 = vadd.f32 0.0, %v246
    %v248 = vpop.f32.mrb[0].mxu0
    %v249 = vpop.f32.mrb[0].mxu0
    %v250 = vadd.f32 0.0, %v249
    %v251 = vpop.f32.mrb[0].mxu0
    %252 = vdwg.mxu0
    %v253 = vadd.f32 %v174, %v247
    %v254 = vadd.f32 %v175, %v250
    %255 = vst.msk [vmem:[#allocation3] sm:$0xff] %vm126, %v253
    %256 = vst.msk [vmem:[#allocation3 + $0x8] sm:$0xff] %vm126, %v254
    // Predicated region
    $region38: #{base_model_nlp_forward.12} parent=1 // pred_check
      %p257 = pneg %p72
    $region39: #{base_model_nlp_forward.12} parent=1 // pred_check_branch
      %259 = sbr.rel (%p257) target = $region41
    $region40: #{base_model_nlp_forward.12} parent=1 // pred_region
      %v260 = vld [vmem:[#allocation3] sm:$0xff]
      %v261 = vld [vmem:[#allocation3 + $0x8] sm:$0xff]
      %v262 = vld [vmem:[#allocation4] sm:$0xff]
      %v263 = vld [vmem:[#allocation4 + $0x8] sm:$0xff]
      %v264 = vadd.f32 %v260, %v262
      %v265 = vadd.f32 %v261, %v263
      %266 = vst.msk [vmem:[#allocation12] sm:$0xff] %vm126, %v264
      %267 = vst.msk [vmem:[#allocation12 + $0x8] sm:$0xff] %vm126, %v265
    $region41: #{base_model_nlp_forward.12} parent=1 // pred_fallthru
      _
    // Predicated region
    $region42: #{base_model_nlp_forward.12} parent=1 // pred_check
      _
    $region43: #{base_model_nlp_forward.12} parent=1 // pred_check_branch
      %269 = sbr.rel (0) target = $region45
    $region44: #{base_model_nlp_forward.12} parent=1 // pred_region
      %s271 = ssub.s32 256, 256
      %272 = vsyncadd [#allocation6], %s271
      %s273 = sshll.u32 [#allocation12], 4
      %s274 = int_to_ptr.vmem [resolvable:$true] %s273
      %279 = dma.vmem_to_hbm [thread:$0]  %s274, 256, %s4, [#allocation6], 128, 128, 8
    $region45: #{base_model_nlp_forward.12} parent=1 // pred_fallthru
      _
    // Predicated region
    $region46: #{base_model_nlp_forward.12} parent=1 // pred_check
      _
    $region47: #{base_model_nlp_forward.12} parent=1 // pred_check_branch
      %281 = sbr.rel (0) target = $region49
    $region48: #{base_model_nlp_forward.12} parent=1 // pred_region
      %282 = dma.done [#allocation6], 256
    $region49: #{base_model_nlp_forward.12} parent=1 // pred_fallthru
      _
    %283 = vsyncpa [#allocation5], 1
    %284 = vsyncpa [#allocation8], 1
    %285 = vsyncpa [#allocation11], 1
    %286 = vsyncpa [#allocation6], 1

// kernel: base_model_nlp_forward.17
$region0: #{base_model_nlp_forward.17}
  #allocation0 [shape = 'u32[]', space=smem, size = 0x4, offset = 0x4, fixed_abs, tag = 'smem constant byte address 0x4 - core index']
  #allocation1 [shape = 'u32[144,128]{1,0:T(1,128)}', space=vmem, size = 0x12000, scoped, tag = 'internal scratch']
  #allocation2 [shape = 'f32[2,32]{1,0:T(2,128)}', space=vmem, size = 0x400, scoped, tag = 'scratch operand']
  %s0 = inlined_call_operand.hbm [shape: f32[2,8,32], index: 0, kind: input, shape index: {}]
  %s1 = inlined_call_operand.hbm [shape: f32[1,32], index: 1, kind: input, shape index: {}]
  %s2 = inlined_call_operand.hbm [shape: f32[32,128], index: 2, kind: input, shape index: {}]
  %s3 = inlined_call_operand.hbm [shape: f32[1,128], index: 3, kind: input, shape index: {}]
  %s4 = inlined_call_operand.hbm [shape: f32[2,128], index: 4, kind: output, shape index: {}]
  %s5 = sld [smem:[#allocation0]]
  $region50: #{base_model_nlp_forward.17} parent=0
    _
  %s7 = ssub.s32 1, %s5
  %s8 = scalar_select 0, %s7, %s5
  $region1: #{base_model_nlp_forward.17} parent=0
    #allocation3 [shape = 'u8[8192]{0}', space=vmem, size = 0x2000, scoped, tag = 'input window, operand 0, single buffered']
    #allocation4 [shape = 's32[1]{0}', space=sflag, size = 0x4, scoped, tag = 'scoped memory for base_model_nlp_forward.17']
    #allocation5 [shape = 's32[1]{0}', space=sflag, size = 0x4, scoped, tag = 'scoped memory for base_model_nlp_forward.17']
    #allocation6 [shape = 'u8[512]{0}', space=vmem, size = 0x400, scoped, tag = 'input window, operand 1, single buffered']
    #allocation7 [shape = 's32[1]{0}', space=sflag, size = 0x4, scoped, tag = 'scoped memory for base_model_nlp_forward.17']
    #allocation8 [shape = 'u8[16384]{0}', space=vmem, size = 0x4000, scoped, tag = 'input window, operand 2, single buffered']
    #allocation9 [shape = 'u8[512]{0}', space=vmem, size = 0x400, scoped, tag = 'input window, operand 3, single buffered']
    #allocation10 [shape = 's32[1]{0}', space=sflag, size = 0x4, scoped, tag = 'scoped memory for base_model_nlp_forward.17']
    #allocation11 [shape = 'u8[1024]{0}', space=vmem, size = 0x400, scoped, tag = 'output window, operand 0, single buffered']
    %9 = vsyncpa [#allocation4], 0
    %10 = vsyncpa [#allocation7], 0
    %11 = vsyncpa [#allocation10], 0
    %12 = vsyncpa [#allocation5], 0
    // Predicated region
    $region2: #{base_model_nlp_forward.17} parent=1 // pred_check
      _
    $region3: #{base_model_nlp_forward.17} parent=1 // pred_check_branch
      %14 = sbr.rel (0) target = $region5
    $region4: #{base_model_nlp_forward.17} parent=1 // pred_region
      %s16 = ssub.s32 256, 256
      %17 = vsyncadd [#allocation4], %s16
      %s18 = sshll.u32 [#allocation3], 4
      %s19 = int_to_ptr.vmem [resolvable:$true] %s18
      %24 = dma.hbm_to_vmem [thread:$0]  %s0, 256, %s19, [#allocation4], 128, 128, 8
    $region5: #{base_model_nlp_forward.17} parent=1 // pred_fallthru
      _
    // Predicated region
    $region6: #{base_model_nlp_forward.17} parent=1 // pred_check
      _
    $region7: #{base_model_nlp_forward.17} parent=1 // pred_check_branch
      %26 = sbr.rel (0) target = $region9
    $region8: #{base_model_nlp_forward.17} parent=1 // pred_region
      %s28 = ssub.s32 16, 16
      %29 = vsyncadd [#allocation7], %s28
      %s31 = sshll.u32 [#allocation6], 4
      %s32 = int_to_ptr.vmem [resolvable:$true] %s31
      %34 = dma.hbm_to_vmem [thread:$0]  %s1, 16, %s32, [#allocation7]
    $region9: #{base_model_nlp_forward.17} parent=1 // pred_fallthru
      _
    // Predicated region
    $region10: #{base_model_nlp_forward.17} parent=1 // pred_check
      _
    $region11: #{base_model_nlp_forward.17} parent=1 // pred_check_branch
      %36 = sbr.rel (0) target = $region13
    $region12: #{base_model_nlp_forward.17} parent=1 // pred_region
      %s38 = ssub.s32 512, 512
      %39 = vsyncadd [#allocation7], %s38
      %s40 = sshll.u32 [#allocation8], 4
      %s41 = int_to_ptr.vmem [resolvable:$true] %s40
      %46 = dma.hbm_to_vmem [thread:$0]  %s2, 512, %s41, [#allocation7], 128, 128, 8
    $region13: #{base_model_nlp_forward.17} parent=1 // pred_fallthru
      _
    // Predicated region
    $region14: #{base_model_nlp_forward.17} parent=1 // pred_check
      _
    $region15: #{base_model_nlp_forward.17} parent=1 // pred_check_branch
      %48 = sbr.rel (0) target = $region17
    $region16: #{base_model_nlp_forward.17} parent=1 // pred_region
      %s50 = ssub.s32 16, 16
      %51 = vsyncadd [#allocation10], %s50
      %s53 = sshll.u32 [#allocation9], 4
      %s54 = int_to_ptr.vmem [resolvable:$true] %s53
      %56 = dma.hbm_to_vmem [thread:$0]  %s3, 16, %s54, [#allocation10]
    $region17: #{base_model_nlp_forward.17} parent=1 // pred_fallthru
      _
    // Predicated region
    $region18: #{base_model_nlp_forward.17} parent=1 // pred_check
      _
    $region19: #{base_model_nlp_forward.17} parent=1 // pred_check_branch
      %58 = sbr.rel (0) target = $region21
    $region20: #{base_model_nlp_forward.17} parent=1 // pred_region
      %59 = dma.done [#allocation4], 256
    $region21: #{base_model_nlp_forward.17} parent=1 // pred_fallthru
      _
    // Predicated region
    $region22: #{base_model_nlp_forward.17} parent=1 // pred_check
      _
    $region23: #{base_model_nlp_forward.17} parent=1 // pred_check_branch
      %61 = sbr.rel (0) target = $region25
    $region24: #{base_model_nlp_forward.17} parent=1 // pred_region
      %62 = dma.done [#allocation7], 16
    $region25: #{base_model_nlp_forward.17} parent=1 // pred_fallthru
      _
    // Predicated region
    $region26: #{base_model_nlp_forward.17} parent=1 // pred_check
      _
    $region27: #{base_model_nlp_forward.17} parent=1 // pred_check_branch
      %64 = sbr.rel (0) target = $region29
    $region28: #{base_model_nlp_forward.17} parent=1 // pred_region
      %65 = dma.done [#allocation7], 512
    $region29: #{base_model_nlp_forward.17} parent=1 // pred_fallthru
      _
    // Predicated region
    $region30: #{base_model_nlp_forward.17} parent=1 // pred_check
      _
    $region31: #{base_model_nlp_forward.17} parent=1 // pred_check_branch
      %67 = sbr.rel (0) target = $region33
    $region32: #{base_model_nlp_forward.17} parent=1 // pred_region
      %68 = dma.done [#allocation10], 16
    $region33: #{base_model_nlp_forward.17} parent=1 // pred_fallthru
      _
    %p69 = scmp.eq.s32.totalorder 0, 0
    // Predicated region
    $region34: #{base_model_nlp_forward.17} parent=1 // pred_check
      %p70 = pneg %p69
    $region35: #{base_model_nlp_forward.17} parent=1 // pred_check_branch
      %72 = sbr.rel (%p70) target = $region37
    $region36: #{base_model_nlp_forward.17} parent=1 // pred_region
      %vm73 = vcmask 254976
      %74 = vst.msk [vmem:[#allocation2] sm:$0x3] %vm73, 0.0
    $region37: #{base_model_nlp_forward.17} parent=1 // pred_fallthru
      _
    %v75 = vld [vmem:[#allocation3] sm:$0xff]
    %v76 = vld [vmem:[#allocation3 + $0x8] sm:$0xff]
    %v77 = vmul.f32 %v75, %v75
    %v78 = vmul.f32 %v76, %v76
    %vm79 = vcmask 261120
    %v80 = vsel %vm79, %v77, 0.0
    %81 = vadd.xlane.f32.xlu0 %v80
    %v82 = vpop.xlane.xlu0 %81
    %v83 = vsel %vm79, %v78, 0.0
    %84 = vadd.xlane.f32.xlu0 %v83
    %v85 = vpop.xlane.xlu0 %84
    %v86 = vrcp.pop 32.0
    %v87 = vmul.f32 %v82, %v86
    %v88 = vmul.f32 %v85, %v86
    %v89 = vadd.f32 %v87, 1e-06
    %v90 = vadd.f32 %v88, 1e-06
    %v91 = vrsqrt.pop %v89
    %v92 = vrsqrt.pop %v90
    %v93 = vmul.f32 %v75, %v91
    %v94 = vmul.f32 %v76, %v92
    %v95 = vld [vmem:[#allocation6] sm:$0x1]
    %v97 = vlaneseq
    %v98 = vshrl.u32 %v97, 7
    %v99 = vsub.s32 0, %v98
    %v100 = vrot.slane %v95, %v99
    %v102 = vmul.f32 %v93, %v100
    %v103 = vmul.f32 %v94, %v100
    %v104 = vld [vmem:[#allocation2] sm:$0x3]
    %v105 = vsel %vm79, %v102, 0.0
    %v106 = vrot.slane %v105, 4
    %v107 = vadd.f32 %v105, %v106
    %v108 = vrot.slane %v107, 2
    %v109 = vadd.f32 %v107, %v108
    %v110 = vrot.slane %v109, 1
    %v111 = vadd.f32 %v109, %v110
    %v112 = vsel %vm79, %v103, 0.0
    %v113 = vrot.slane %v112, 4
    %v114 = vadd.f32 %v112, %v113
    %v115 = vrot.slane %v114, 2
    %v116 = vadd.f32 %v114, %v115
    %v117 = vrot.slane %v116, 1
    %v118 = vadd.f32 %v116, %v117
    %vm121 = vcmask 1041409
    %v122 = vsel %vm121, %v118, %v111
    %v124 = vadd.f32 %v104, %v122
    %vm125 = vcmask 254976
    %126 = vst.msk [vmem:[#allocation2] sm:$0x3] %vm125, %v124
    // Predicated region
    $region38: #{base_model_nlp_forward.17} parent=1 // pred_check
      %p127 = pneg %p69
    $region39: #{base_model_nlp_forward.17} parent=1 // pred_check_branch
      %129 = sbr.rel (%p127) target = $region41
    $region40: #{base_model_nlp_forward.17} parent=1 // pred_region
      %v130 = vld [vmem:[#allocation2] sm:$0x3]
      %v131 = vmul.f32 %v130, 0.125
      %v132 = vld [vmem:[#allocation8] sm:$0xff]
      %v133 = vld [vmem:[#allocation8 + $0x8] sm:$0xff]
      %v134 = vld [vmem:[#allocation8 + $0x10] sm:$0xff]
      %v135 = vld [vmem:[#allocation8 + $0x18] sm:$0xff]
      %v136 = vld [vmem:[#allocation9] sm:$0x1]
      %v138 = vlaneseq
      %v139 = vshrl.u32 %v138, 7
      %v140 = vsub.s32 0, %v139
      %v141 = vrot.slane %v136, %v140
      %v144 = vsel %vm79, %v131, 0
      %146 = vmatprep.subr.mxu0 0.0
      %147 = vmatpush1.msra.mxu0 %v132
      %148 = vmatprep.subr.mxu0 0.0
      %149 = vmatpush1.msra.mxu0 %v133
      %150 = vmatprep.subr.mxu0 0.0
      %151 = vmatpush1.msra.mxu0 %v134
      %152 = vmatprep.subr.mxu0 0.0
      %153 = vmatpush1.msra.mxu0 %v135
      %154 = vmatprep.subr.mxu0 0.0
      %155 = vmatpush1.msra.mxu0 0.0
      %156 = vmatprep.subr.mxu0 0.0
      %157 = vmatpush1.msra.mxu0 0.0
      %158 = vmatprep.subr.mxu0 0.0
      %159 = vmatpush1.msra.mxu0 0.0
      %160 = vmatprep.subr.mxu0 0.0
      %161 = vmatpush1.msra.mxu0 0.0
      %162 = vmatprep.subr.mxu0 0.0
      %163 = vmatpush1.msra.mxu0 0.0
      %164 = vmatprep.subr.mxu0 0.0
      %165 = vmatpush1.msra.mxu0 0.0
      %166 = vmatprep.subr.mxu0 0.0
      %167 = vmatpush1.msra.mxu0 0.0
      %168 = vmatprep.subr.mxu0 0.0
      %169 = vmatpush1.msra.mxu0 0.0
      %170 = vmatprep.subr.mxu0 0.0
      %171 = vmatpush1.msra.mxu0 0.0
      %172 = vmatprep.subr.mxu0 0.0
      %173 = vmatpush1.msra.mxu0 0.0
      %174 = vmatprep.subr.mxu0 0.0
      %175 = vmatpush1.msra.mxu0 0.0
      %176 = vmatprep.subr.mxu0 0.0
      %177 = vmatpush1.msra.mxu0 0.0
      %178 = vmatprep.subr.mxu0 0.0
      %179 = vmatpush1.msra.mxu0 0.0
      %180 = vmatprep.subr.mxu0 0.0
      %181 = vmatpush1.msra.mxu0 0.0
      %182 = vmatprep.subr.mxu0 0.0
      %183 = vmatpush1.msra.mxu0 0.0
      %184 = vmatprep.subr.mxu0 0.0
      %185 = vmatpush1.msra.mxu0 0.0
      %186 = vmatprep.subr.mxu0 0.0
      %187 = vmatpush1.msra.mxu0 0.0
      %188 = vmatprep.subr.mxu0 0.0
      %189 = vmatpush1.msra.mxu0 0.0
      %190 = vmatprep.subr.mxu0 0.0
      %191 = vmatpush1.msra.mxu0 0.0
      %192 = vmatprep.subr.mxu0 0.0
      %193 = vmatpush1.msra.mxu0 0.0
      %194 = vmatprep.subr.mxu0 0.0
      %195 = vmatpush1.msra.mxu0 0.0
      %196 = vmatprep.subr.mxu0 0.0
      %197 = vmatpush1.msra.mxu0 0.0
      %198 = vmatprep.subr.mxu0 0.0
      %199 = vmatpush1.msra.mxu0 0.0
      %200 = vmatprep.subr.mxu0 0.0
      %201 = vmatpush1.msra.mxu0 0.0
      %202 = vmatprep.subr.mxu0 0.0
      %203 = vmatpush1.msra.mxu0 0.0
      %204 = vmatprep.subr.mxu0 0.0
      %205 = vmatpush1.msra.mxu0 0.0
      %206 = vmatprep.subr.mxu0 0.0
      %207 = vmatpush1.msra.mxu0 0.0
      %208 = vmatprep.subr.mxu0 0.0
      %209 = vmatpush1.msra.mxu0 0.0
      %210 = vmatprep.mubr.f32.mxu0 0.0
      %211 = vmatmul.mubr.f32.gmra.mrb[0].mxu0 %v144
      %v212 = vpop.f32.mrb[0].mxu0
      %v213 = vadd.f32 %v141, %v212
      %v214 = vpop.f32.mrb[0].mxu0
      %215 = vdwg.mxu0
      %216 = vst [vmem:[#allocation11] sm:$0x3] %v213
    $region41: #{base_model_nlp_forward.17} parent=1 // pred_fallthru
      _
    // Predicated region
    $region42: #{base_model_nlp_forward.17} parent=1 // pred_check
      _
    $region43: #{base_model_nlp_forward.17} parent=1 // pred_check_branch
      %218 = sbr.rel (0) target = $region45
    $region44: #{base_model_nlp_forward.17} parent=1 // pred_region
      %s220 = ssub.s32 32, 32
      %221 = vsyncadd [#allocation5], %s220
      %s223 = sshll.u32 [#allocation11], 4
      %s224 = int_to_ptr.vmem [resolvable:$true] %s223
      %226 = dma.vmem_to_hbm [thread:$0]  %s224, 32, %s4, [#allocation5]
    $region45: #{base_model_nlp_forward.17} parent=1 // pred_fallthru
      _
    // Predicated region
    $region46: #{base_model_nlp_forward.17} parent=1 // pred_check
      _
    $region47: #{base_model_nlp_forward.17} parent=1 // pred_check_branch
      %228 = sbr.rel (0) target = $region49
    $region48: #{base_model_nlp_forward.17} parent=1 // pred_region
      %229 = dma.done [#allocation5], 32
    $region49: #{base_model_nlp_forward.17} parent=1 // pred_fallthru
      _
    %230 = vsyncpa [#allocation4], 1
    %231 = vsyncpa [#allocation7], 1
    %232 = vsyncpa [#allocation10], 1
    %233 = vsyncpa [#allocation5], 1

</llo_original>
